<compile_context>
chip_gen: v7x
topology: tpu7x:2x2x1
jax: 0.10.0
libtpu: 0.0.40
codegen_flags: <defaults>
</compile_context>

<pallas_src>
import jax
import jax.numpy as jnp
from jax.experimental import pallas as pl
from jax.experimental.pallas import tpu as pltpu


# ---------------------------------------------------------------------------
# Per-tap validity mask for SAME-padded depthwise conv on the flattened
# spatial axis.  Row/col out-of-range taps contribute zero.
# ---------------------------------------------------------------------------
def _dw_tap_mask(H, W, K):
    pad = (K - 1) // 2
    y = jnp.arange(H)[:, None]
    x = jnp.arange(W)[None, :]
    rows = []
    for oy in range(-pad, pad + 1):
        for ox in range(-pad, pad + 1):
            valid = ((y + oy >= 0) & (y + oy < H) &
                     (x + ox >= 0) & (x + ox < W))
            rows.append(valid.reshape(-1))
    return jnp.stack(rows).astype(jnp.float32)          # (K*K, H*W)


# ---------------------------------------------------------------------------
# Fused MBConv kernel (one grid step == one batch element)
# ---------------------------------------------------------------------------
def _make_mbconv_kernel(K, H, W, c0, add_residual):
    pad = (K - 1) // 2
    M = H * W
    inv_m = 1.0 / float(M)

    def kernel(x_ref, mask_ref, w_exp_ref, s0_ref, b0_ref,
               w_dw_ref, s1_ref, b1_ref,
               w_sr_ref, b_sr_ref, w_se_ref, b_se_ref,
               w_pr_ref, s2_ref, b2_ref,
               o_ref, dwpad_ref):
        f32 = jnp.float32
        x = x_ref[0].astype(f32)                                     # (Cin, M)

        # ---- expand 1x1 conv + folded BN0 + swish (MXU, lane-dense out) ----
        h = jnp.dot(w_exp_ref[...].astype(f32), x,
                    preferred_element_type=f32)                      # (oup, M)
        h = h * s0_ref[...] + b0_ref[...]
        h = h * jax.nn.sigmoid(h)

        # ---- depthwise KxK conv (SAME, stride 1) + folded BN1 + swish ----
        # In-kernel padding: h is placed at a 128-aligned lane offset c0 inside
        # a zero-filled flat scratch; each tap is a static lane-offset slice,
        # masked by the precomputed validity mask.
        dwpad_ref[...] = jnp.zeros(dwpad_ref.shape, f32)
        dwpad_ref[:, c0:c0 + M] = h
        hp = dwpad_ref[...]                                          # (oup, PADLEN)
        wdw = w_dw_ref[...].astype(f32)                              # (oup, K*K)
        msk = mask_ref[...]                                          # (K*K, M)
        acc = jnp.zeros_like(h)
        t = 0
        for oy in range(-pad, pad + 1):
            for ox in range(-pad, pad + 1):
                s = c0 + oy * W + ox
                acc = acc + wdw[:, t:t + 1] * (hp[:, s:s + M] * msk[t:t + 1, :])
                t += 1
        acc = acc * s1_ref[...] + b1_ref[...]
        acc = acc * jax.nn.sigmoid(acc)                              # (oup, M)

        # ---- squeeze & excitation (pool fused; tiny convs on VPU/XLU) ----
        pooled = jnp.sum(acc, axis=1, keepdims=True) * inv_m         # (oup, 1)
        sr = jnp.sum(w_sr_ref[...].astype(f32) * pooled, axis=0,
                     keepdims=True) + b_sr_ref[...]                  # (1, Cs)
        sr = sr * jax.nn.sigmoid(sr)
        se = jnp.sum(w_se_ref[...].astype(f32) * sr, axis=1,
                     keepdims=True) + b_se_ref[...]                  # (oup, 1)
        g = acc * jax.nn.sigmoid(se)                                 # (oup, M)

        # ---- project 1x1 conv + folded BN2 (no activation) + id-skip ----
        y = jnp.dot(w_pr_ref[...].astype(f32), g,
                    preferred_element_type=f32)                      # (Cout, M)
        y = y * s2_ref[...] + b2_ref[...]
        if add_residual:
            y = y + x
        o_ref[0] = y.astype(o_ref.dtype)

    return kernel


def mbconv_forward(x_nchw, p, K=3, add_residual=True):
    N, Cin, H, W = x_nchw.shape
    M = H * W
    oup = p['w_exp'].shape[0]
    Cout = p['w_proj'].shape[0]
    Cs = p['w_se_r_t'].shape[1]
    KK = K * K
    pad = (K - 1) // 2
    if add_residual:
        assert Cin == Cout, "identity skip requires input_filters == output_filters"

    # 128-aligned lane offset of the real data inside the flat padded scratch.
    c0 = ((pad * (W + 1) + 127) // 128) * 128
    padlen = 2 * c0 + M

    x3 = x_nchw.reshape(N, Cin, M)      # free reshape: lane-dense (C, H*W) layout
    mask = _dw_tap_mask(H, W, K)        # (K*K, M)

    kernel = _make_mbconv_kernel(K, H, W, c0, add_residual)

    out3 = pl.pallas_call(
        kernel,
        out_shape=jax.ShapeDtypeStruct((N, Cout, M), x_nchw.dtype),
        grid_spec=pltpu.PrefetchScalarGridSpec(
            num_scalar_prefetch=0,
            grid=(N,),
            in_specs=[
                pl.BlockSpec((1, Cin, M), lambda n: (n, 0, 0)),   # x
                pl.BlockSpec((KK, M), lambda n: (0, 0)),          # dw tap masks
                pl.BlockSpec((oup, Cin), lambda n: (0, 0)),       # expand weight
                pl.BlockSpec((oup, 1), lambda n: (0, 0)),         # bn0 scale
                pl.BlockSpec((oup, 1), lambda n: (0, 0)),         # bn0 bias
                pl.BlockSpec((oup, KK), lambda n: (0, 0)),        # dw weight
                pl.BlockSpec((oup, 1), lambda n: (0, 0)),         # bn1 scale
                pl.BlockSpec((oup, 1), lambda n: (0, 0)),         # bn1 bias
                pl.BlockSpec((oup, Cs), lambda n: (0, 0)),        # se reduce w^T
                pl.BlockSpec((1, Cs), lambda n: (0, 0)),          # se reduce bias
                pl.BlockSpec((oup, Cs), lambda n: (0, 0)),        # se expand w
                pl.BlockSpec((oup, 1), lambda n: (0, 0)),         # se expand bias
                pl.BlockSpec((Cout, oup), lambda n: (0, 0)),      # project weight
                pl.BlockSpec((Cout, 1), lambda n: (0, 0)),        # bn2 scale
                pl.BlockSpec((Cout, 1), lambda n: (0, 0)),        # bn2 bias
            ],
            out_specs=pl.BlockSpec((1, Cout, M), lambda n: (n, 0, 0)),
            scratch_shapes=[pltpu.VMEM((oup, padlen), jnp.float32)],
        ),
        compiler_params=pltpu.CompilerParams(
            dimension_semantics=("parallel",)),
    )(x3, mask, p['w_exp'], p['scale0'], p['bias0'],
      p['w_dw'], p['scale1'], p['bias1'],
      p['w_se_r_t'], p['b_se_r'], p['w_se_e'], p['b_se_e'],
      p['w_proj'], p['scale2'], p['bias2'])
    return out3.reshape(N, Cout, H, W)


# ---------------------------------------------------------------------------
# Pure-JAX reference (same math, no Pallas) for validation
# ---------------------------------------------------------------------------
def mbconv_reference(x_nchw, p, K=3, add_residual=True):
    N, Cin, H, W = x_nchw.shape
    pad = (K - 1) // 2
    oup = p['w_exp'].shape[0]
    Cout = p['w_proj'].shape[0]

    h = jnp.einsum('oi,nihw->nohw', p['w_exp'], x_nchw)
    h = h * p['scale0'].reshape(1, oup, 1, 1) + p['bias0'].reshape(1, oup, 1, 1)
    h = h * jax.nn.sigmoid(h)

    hp = jnp.pad(h, ((0, 0), (0, 0), (pad, pad), (pad, pad)))
    acc = jnp.zeros_like(h)
    t = 0
    for dy in range(K):
        for dx in range(K):
            w_t = p['w_dw'][:, t].reshape(1, oup, 1, 1)
            acc = acc + hp[:, :, dy:dy + H, dx:dx + W] * w_t
            t += 1
    acc = acc * p['scale1'].reshape(1, oup, 1, 1) + p['bias1'].reshape(1, oup, 1, 1)
    acc = acc * jax.nn.sigmoid(acc)

    pooled = acc.mean(axis=(2, 3))                       # (N, oup)
    sr = pooled @ p['w_se_r_t'] + p['b_se_r']            # (N, Cs)
    sr = sr * jax.nn.sigmoid(sr)
    se = sr @ p['w_se_e'].T + p['b_se_e'].reshape(1, -1)  # (N, oup)
    acc = acc * jax.nn.sigmoid(se)[:, :, None, None]

    y = jnp.einsum('oi,nihw->nohw', p['w_proj'], acc)
    y = y * p['scale2'].reshape(1, Cout, 1, 1) + p['bias2'].reshape(1, Cout, 1, 1)
    if add_residual:
        y = y + x_nchw
    return y


def fold_bn(gamma, beta, mean, var, eps):
    scale = gamma / jnp.sqrt(var + eps)
    bias = beta - mean * scale
    return scale.reshape(-1, 1), bias.reshape(-1, 1)


if __name__ == "__main__":
    # BlockArgs: input_filters=8, output_filters=8, expand_ratio=2,
    # kernel_size=3, stride=1, se_ratio=0.25, id_skip=True -> skip active.
    N, Cin, H, W = 2, 8, 16, 16
    expand_ratio, K = 2, 3
    oup = Cin * expand_ratio                     # 16
    Cs = max(1, int(Cin * 0.25))                 # 2
    Cout = Cin                                   # 8 (== input_filters -> id skip)
    eps = 1e-3

    key = jax.random.PRNGKey(0)
    ks = jax.random.split(key, 16)

    def nrm(k, shape, s=0.1):
        return (s * jax.random.normal(k, shape)).astype(jnp.float32)

    p = {
        # expand conv: torch weight (oup, inp, 1, 1) -> (oup, inp)
        'w_exp': nrm(ks[0], (oup, Cin)),
        # depthwise conv: torch weight (oup, 1, K, K) -> (oup, K*K), taps row-major
        'w_dw': nrm(ks[1], (oup, K * K)),
        # SE reduce conv: torch weight (Cs, oup, 1, 1) transposed -> (oup, Cs)
        'w_se_r_t': nrm(ks[2], (oup, Cs)),
        'b_se_r': nrm(ks[3], (1, Cs)),
        # SE expand conv: torch weight (oup, Cs, 1, 1) -> (oup, Cs)
        'w_se_e': nrm(ks[4], (oup, Cs)),
        'b_se_e': nrm(ks[5], (oup, 1)),
        # project conv: torch weight (Cout, oup, 1, 1) -> (Cout, oup)
        'w_proj': nrm(ks[6], (Cout, oup)),
    }
    # BatchNorm (inference mode), folded to per-channel (C, 1) scale/bias
    p['scale0'], p['bias0'] = fold_bn(1.0 + nrm(ks[7], (oup,)), nrm(ks[8], (oup,)),
                                      nrm(ks[9], (oup,)),
                                      1.0 + jnp.abs(nrm(ks[10], (oup,))), eps)
    p['scale1'], p['bias1'] = fold_bn(1.0 + nrm(ks[11], (oup,)), nrm(ks[12], (oup,)),
                                      nrm(ks[13], (oup,)),
                                      1.0 + jnp.abs(nrm(ks[14], (oup,))), eps)
    p['scale2'], p['bias2'] = fold_bn(jnp.ones((Cout,), jnp.float32),
                                      jnp.zeros((Cout,), jnp.float32),
                                      jnp.zeros((Cout,), jnp.float32),
                                      jnp.ones((Cout,), jnp.float32), eps)

    x = jax.random.normal(ks[15], (N, Cin, H, W), dtype=jnp.float32)

    out = jax.block_until_ready(mbconv_forward(x, p, K=K))
    ref = jax.block_until_ready(mbconv_reference(x, p, K=K))

    assert out.shape == (N, Cout, H, W), out.shape
    max_err = float(jnp.max(jnp.abs(out - ref)))
    assert jnp.allclose(out, ref, atol=2e-4, rtol=2e-4), max_err
    print("KERNEL_OK")
</pallas_src>

<mosaic_0001>
module attributes {stable_mosaic.version = 11 : i64} {
  func.func @kernel(%arg0: i32, %arg1: memref<1x8x256xf32, #tpu.memory_space<vmem>>, %arg2: memref<9x256xf32, #tpu.memory_space<vmem>>, %arg3: memref<16x8xf32, #tpu.memory_space<vmem>>, %arg4: memref<16x1xf32, #tpu.memory_space<vmem>>, %arg5: memref<16x1xf32, #tpu.memory_space<vmem>>, %arg6: memref<16x9xf32, #tpu.memory_space<vmem>>, %arg7: memref<16x1xf32, #tpu.memory_space<vmem>>, %arg8: memref<16x1xf32, #tpu.memory_space<vmem>>, %arg9: memref<16x2xf32, #tpu.memory_space<vmem>>, %arg10: memref<1x2xf32, #tpu.memory_space<vmem>>, %arg11: memref<16x2xf32, #tpu.memory_space<vmem>>, %arg12: memref<16x1xf32, #tpu.memory_space<vmem>>, %arg13: memref<8x16xf32, #tpu.memory_space<vmem>>, %arg14: memref<8x1xf32, #tpu.memory_space<vmem>>, %arg15: memref<8x1xf32, #tpu.memory_space<vmem>>, %arg16: memref<1x8x256xf32, #tpu.memory_space<vmem>>, %arg17: memref<16x512xf32, #tpu.memory_space<vmem>>) attributes {dimension_semantics = [#tpu.dimension_semantics<parallel>], iteration_bounds = array<i64: 2>, scalar_prefetch = 0 : i64, scratch_operands = 1 : i64, tpu.core_type = #tpu.core_type<tc>, window_params = [{transform_indices = @transform_0, window_bounds = array<i64: 1, 8, 256>}, {pipeline_mode = #tpu.pipeline_mode<synchronous>, transform_indices = @transform_1, window_bounds = array<i64: 9, 256>}, {pipeline_mode = #tpu.pipeline_mode<synchronous>, transform_indices = @transform_2, window_bounds = array<i64: 16, 8>}, {pipeline_mode = #tpu.pipeline_mode<synchronous>, transform_indices = @transform_3, window_bounds = array<i64: 16, 1>}, {pipeline_mode = #tpu.pipeline_mode<synchronous>, transform_indices = @transform_4, window_bounds = array<i64: 16, 1>}, {pipeline_mode = #tpu.pipeline_mode<synchronous>, transform_indices = @transform_5, window_bounds = array<i64: 16, 9>}, {pipeline_mode = #tpu.pipeline_mode<synchronous>, transform_indices = @transform_6, window_bounds = array<i64: 16, 1>}, {pipeline_mode = #tpu.pipeline_mode<synchronous>, transform_indices = @transform_7, window_bounds = array<i64: 16, 1>}, {pipeline_mode = #tpu.pipeline_mode<synchronous>, transform_indices = @transform_8, window_bounds = array<i64: 16, 2>}, {pipeline_mode = #tpu.pipeline_mode<synchronous>, transform_indices = @transform_9, window_bounds = array<i64: 1, 2>}, {pipeline_mode = #tpu.pipeline_mode<synchronous>, transform_indices = @transform_10, window_bounds = array<i64: 16, 2>}, {pipeline_mode = #tpu.pipeline_mode<synchronous>, transform_indices = @transform_11, window_bounds = array<i64: 16, 1>}, {pipeline_mode = #tpu.pipeline_mode<synchronous>, transform_indices = @transform_12, window_bounds = array<i64: 8, 16>}, {pipeline_mode = #tpu.pipeline_mode<synchronous>, transform_indices = @transform_13, window_bounds = array<i64: 8, 1>}, {pipeline_mode = #tpu.pipeline_mode<synchronous>, transform_indices = @transform_14, window_bounds = array<i64: 8, 1>}, {transform_indices = @transform_15, window_bounds = array<i64: 1, 8, 256>}]} {
    %c0 = arith.constant 0 : index
    %c0_0 = arith.constant 0 : index
    %c0_1 = arith.constant 0 : index
    %0 = vector.load %arg1[%c0, %c0_0, %c0_1] : memref<1x8x256xf32, #tpu.memory_space<vmem>>, vector<1x8x256xf32>
    %1 = vector.shape_cast %0 : vector<1x8x256xf32> to vector<8x256xf32>
    %c0_2 = arith.constant 0 : index
    %c0_3 = arith.constant 0 : index
    %2 = vector.load %arg3[%c0_2, %c0_3] : memref<16x8xf32, #tpu.memory_space<vmem>>, vector<16x8xf32>
    %cst = arith.constant dense<0.000000e+00> : vector<16x256xf32>
    %3 = tpu.matmul %2, %1, %cst {dimension_numbers = #tpu.dot_dimension_numbers<[1], [0], [0], [1], [0, 0, 1, 1], [], []>} : vector<16x8xf32>, vector<8x256xf32>, vector<16x256xf32> -> vector<16x256xf32>
    %c0_4 = arith.constant 0 : index
    %c0_5 = arith.constant 0 : index
    %4 = vector.load %arg4[%c0_4, %c0_5] : memref<16x1xf32, #tpu.memory_space<vmem>>, vector<16x1xf32>
    %5 = vector.broadcast %4 : vector<16x1xf32> to vector<16x256xf32>
    %6 = arith.mulf %3, %5 : vector<16x256xf32>
    %c0_6 = arith.constant 0 : index
    %c0_7 = arith.constant 0 : index
    %7 = vector.load %arg5[%c0_6, %c0_7] : memref<16x1xf32, #tpu.memory_space<vmem>>, vector<16x1xf32>
    %8 = vector.broadcast %7 : vector<16x1xf32> to vector<16x256xf32>
    %9 = arith.addf %6, %8 : vector<16x256xf32>
    %10 = arith.negf %9 : vector<16x256xf32>
    %11 = math.exp %10 : vector<16x256xf32>
    %cst_8 = arith.constant 1.000000e+00 : f32
    %12 = vector.broadcast %cst_8 : f32 to vector<16x256xf32>
    %13 = arith.addf %12, %11 : vector<16x256xf32>
    %14 = arith.divf %12, %13 : vector<16x256xf32>
    %15 = arith.mulf %9, %14 : vector<16x256xf32>
    %cst_9 = arith.constant 0.000000e+00 : f32
    %16 = vector.broadcast %cst_9 : f32 to vector<16x512xf32>
    %c0_10 = arith.constant 0 : index
    %c0_11 = arith.constant 0 : index
    %17 = vector.load %arg17[%c0_10, %c0_11] : memref<16x512xf32, #tpu.memory_space<vmem>>, vector<16x512xf32>
    tpu.vector_store %arg17[%c0_10, %c0_11], %16 {strides = array<i32>} : memref<16x512xf32, #tpu.memory_space<vmem>>, vector<16x512xf32>,
    %c0_12 = arith.constant 0 : index
    %c128 = arith.constant 128 : index
    %18 = vector.load %arg17[%c0_12, %c128] : memref<16x512xf32, #tpu.memory_space<vmem>>, vector<16x256xf32>
    tpu.vector_store %arg17[%c0_12, %c128], %15 {strides = array<i32>} : memref<16x512xf32, #tpu.memory_space<vmem>>, vector<16x256xf32>,
    %c0_13 = arith.constant 0 : index
    %c0_14 = arith.constant 0 : index
    %19 = vector.load %arg17[%c0_13, %c0_14] : memref<16x512xf32, #tpu.memory_space<vmem>>, vector<16x512xf32>
    %c0_15 = arith.constant 0 : index
    %c0_16 = arith.constant 0 : index
    %20 = vector.load %arg6[%c0_15, %c0_16] : memref<16x9xf32, #tpu.memory_space<vmem>>, vector<16x9xf32>
    %c0_17 = arith.constant 0 : index
    %c0_18 = arith.constant 0 : index
    %21 = vector.load %arg2[%c0_17, %c0_18] : memref<9x256xf32, #tpu.memory_space<vmem>>, vector<9x256xf32>
    %cst_19 = arith.constant 0.000000e+00 : f32
    %22 = vector.broadcast %cst_19 : f32 to vector<16x256xf32>
    %23 = vector.extract_strided_slice %20 {offsets = [0, 0], sizes = [16, 1], strides = [1, 1]} : vector<16x9xf32> to vector<16x1xf32>
    %24 = vector.extract_strided_slice %19 {offsets = [0, 111], sizes = [16, 256], strides = [1, 1]} : vector<16x512xf32> to vector<16x256xf32>
    %25 = vector.extract_strided_slice %21 {offsets = [0, 0], sizes = [1, 256], strides = [1, 1]} : vector<9x256xf32> to vector<1x256xf32>
    %26 = vector.broadcast %25 : vector<1x256xf32> to vector<16x256xf32>
    %27 = arith.mulf %24, %26 : vector<16x256xf32>
    %28 = vector.broadcast %23 : vector<16x1xf32> to vector<16x256xf32>
    %29 = arith.mulf %28, %27 : vector<16x256xf32>
    %30 = arith.addf %22, %29 : vector<16x256xf32>
    %31 = vector.extract_strided_slice %20 {offsets = [0, 1], sizes = [16, 1], strides = [1, 1]} : vector<16x9xf32> to vector<16x1xf32>
    %32 = vector.extract_strided_slice %19 {offsets = [0, 112], sizes = [16, 256], strides = [1, 1]} : vector<16x512xf32> to vector<16x256xf32>
    %33 = vector.extract_strided_slice %21 {offsets = [1, 0], sizes = [1, 256], strides = [1, 1]} : vector<9x256xf32> to vector<1x256xf32>
    %34 = vector.broadcast %33 : vector<1x256xf32> to vector<16x256xf32>
    %35 = arith.mulf %32, %34 : vector<16x256xf32>
    %36 = vector.broadcast %31 : vector<16x1xf32> to vector<16x256xf32>
    %37 = arith.mulf %36, %35 : vector<16x256xf32>
    %38 = arith.addf %30, %37 : vector<16x256xf32>
    %39 = vector.extract_strided_slice %20 {offsets = [0, 2], sizes = [16, 1], strides = [1, 1]} : vector<16x9xf32> to vector<16x1xf32>
    %40 = vector.extract_strided_slice %19 {offsets = [0, 113], sizes = [16, 256], strides = [1, 1]} : vector<16x512xf32> to vector<16x256xf32>
    %41 = vector.extract_strided_slice %21 {offsets = [2, 0], sizes = [1, 256], strides = [1, 1]} : vector<9x256xf32> to vector<1x256xf32>
    %42 = vector.broadcast %41 : vector<1x256xf32> to vector<16x256xf32>
    %43 = arith.mulf %40, %42 : vector<16x256xf32>
    %44 = vector.broadcast %39 : vector<16x1xf32> to vector<16x256xf32>
    %45 = arith.mulf %44, %43 : vector<16x256xf32>
    %46 = arith.addf %38, %45 : vector<16x256xf32>
    %47 = vector.extract_strided_slice %20 {offsets = [0, 3], sizes = [16, 1], strides = [1, 1]} : vector<16x9xf32> to vector<16x1xf32>
    %48 = vector.extract_strided_slice %19 {offsets = [0, 127], sizes = [16, 256], strides = [1, 1]} : vector<16x512xf32> to vector<16x256xf32>
    %49 = vector.extract_strided_slice %21 {offsets = [3, 0], sizes = [1, 256], strides = [1, 1]} : vector<9x256xf32> to vector<1x256xf32>
    %50 = vector.broadcast %49 : vector<1x256xf32> to vector<16x256xf32>
    %51 = arith.mulf %48, %50 : vector<16x256xf32>
    %52 = vector.broadcast %47 : vector<16x1xf32> to vector<16x256xf32>
    %53 = arith.mulf %52, %51 : vector<16x256xf32>
    %54 = arith.addf %46, %53 : vector<16x256xf32>
    %55 = vector.extract_strided_slice %20 {offsets = [0, 4], sizes = [16, 1], strides = [1, 1]} : vector<16x9xf32> to vector<16x1xf32>
    %56 = vector.extract_strided_slice %19 {offsets = [0, 128], sizes = [16, 256], strides = [1, 1]} : vector<16x512xf32> to vector<16x256xf32>
    %57 = vector.extract_strided_slice %21 {offsets = [4, 0], sizes = [1, 256], strides = [1, 1]} : vector<9x256xf32> to vector<1x256xf32>
    %58 = vector.broadcast %57 : vector<1x256xf32> to vector<16x256xf32>
    %59 = arith.mulf %56, %58 : vector<16x256xf32>
    %60 = vector.broadcast %55 : vector<16x1xf32> to vector<16x256xf32>
    %61 = arith.mulf %60, %59 : vector<16x256xf32>
    %62 = arith.addf %54, %61 : vector<16x256xf32>
    %63 = vector.extract_strided_slice %20 {offsets = [0, 5], sizes = [16, 1], strides = [1, 1]} : vector<16x9xf32> to vector<16x1xf32>
    %64 = vector.extract_strided_slice %19 {offsets = [0, 129], sizes = [16, 256], strides = [1, 1]} : vector<16x512xf32> to vector<16x256xf32>
    %65 = vector.extract_strided_slice %21 {offsets = [5, 0], sizes = [1, 256], strides = [1, 1]} : vector<9x256xf32> to vector<1x256xf32>
    %66 = vector.broadcast %65 : vector<1x256xf32> to vector<16x256xf32>
    %67 = arith.mulf %64, %66 : vector<16x256xf32>
    %68 = vector.broadcast %63 : vector<16x1xf32> to vector<16x256xf32>
    %69 = arith.mulf %68, %67 : vector<16x256xf32>
    %70 = arith.addf %62, %69 : vector<16x256xf32>
    %71 = vector.extract_strided_slice %20 {offsets = [0, 6], sizes = [16, 1], strides = [1, 1]} : vector<16x9xf32> to vector<16x1xf32>
    %72 = vector.extract_strided_slice %19 {offsets = [0, 143], sizes = [16, 256], strides = [1, 1]} : vector<16x512xf32> to vector<16x256xf32>
    %73 = vector.extract_strided_slice %21 {offsets = [6, 0], sizes = [1, 256], strides = [1, 1]} : vector<9x256xf32> to vector<1x256xf32>
    %74 = vector.broadcast %73 : vector<1x256xf32> to vector<16x256xf32>
    %75 = arith.mulf %72, %74 : vector<16x256xf32>
    %76 = vector.broadcast %71 : vector<16x1xf32> to vector<16x256xf32>
    %77 = arith.mulf %76, %75 : vector<16x256xf32>
    %78 = arith.addf %70, %77 : vector<16x256xf32>
    %79 = vector.extract_strided_slice %20 {offsets = [0, 7], sizes = [16, 1], strides = [1, 1]} : vector<16x9xf32> to vector<16x1xf32>
    %80 = vector.extract_strided_slice %19 {offsets = [0, 144], sizes = [16, 256], strides = [1, 1]} : vector<16x512xf32> to vector<16x256xf32>
    %81 = vector.extract_strided_slice %21 {offsets = [7, 0], sizes = [1, 256], strides = [1, 1]} : vector<9x256xf32> to vector<1x256xf32>
    %82 = vector.broadcast %81 : vector<1x256xf32> to vector<16x256xf32>
    %83 = arith.mulf %80, %82 : vector<16x256xf32>
    %84 = vector.broadcast %79 : vector<16x1xf32> to vector<16x256xf32>
    %85 = arith.mulf %84, %83 : vector<16x256xf32>
    %86 = arith.addf %78, %85 : vector<16x256xf32>
    %87 = vector.extract_strided_slice %20 {offsets = [0, 8], sizes = [16, 1], strides = [1, 1]} : vector<16x9xf32> to vector<16x1xf32>
    %88 = vector.extract_strided_slice %19 {offsets = [0, 145], sizes = [16, 256], strides = [1, 1]} : vector<16x512xf32> to vector<16x256xf32>
    %89 = vector.extract_strided_slice %21 {offsets = [8, 0], sizes = [1, 256], strides = [1, 1]} : vector<9x256xf32> to vector<1x256xf32>
    %90 = vector.broadcast %89 : vector<1x256xf32> to vector<16x256xf32>
    %91 = arith.mulf %88, %90 : vector<16x256xf32>
    %92 = vector.broadcast %87 : vector<16x1xf32> to vector<16x256xf32>
    %93 = arith.mulf %92, %91 : vector<16x256xf32>
    %94 = arith.addf %86, %93 : vector<16x256xf32>
    %c0_20 = arith.constant 0 : index
    %c0_21 = arith.constant 0 : index
    %95 = vector.load %arg7[%c0_20, %c0_21] : memref<16x1xf32, #tpu.memory_space<vmem>>, vector<16x1xf32>
    %96 = vector.broadcast %95 : vector<16x1xf32> to vector<16x256xf32>
    %97 = arith.mulf %94, %96 : vector<16x256xf32>
    %c0_22 = arith.constant 0 : index
    %c0_23 = arith.constant 0 : index
    %98 = vector.load %arg8[%c0_22, %c0_23] : memref<16x1xf32, #tpu.memory_space<vmem>>, vector<16x1xf32>
    %99 = vector.broadcast %98 : vector<16x1xf32> to vector<16x256xf32>
    %100 = arith.addf %97, %99 : vector<16x256xf32>
    %101 = arith.negf %100 : vector<16x256xf32>
    %102 = math.exp %101 : vector<16x256xf32>
    %cst_24 = arith.constant 1.000000e+00 : f32
    %103 = vector.broadcast %cst_24 : f32 to vector<16x256xf32>
    %104 = arith.addf %103, %102 : vector<16x256xf32>
    %105 = arith.divf %103, %104 : vector<16x256xf32>
    %106 = arith.mulf %100, %105 : vector<16x256xf32>
    %cst_25 = arith.constant dense<0.000000e+00> : vector<16xf32>
    %107 = vector.multi_reduction <add>, %106, %cst_25 [1] : vector<16x256xf32> to vector<16xf32>
    %108 = vector.shape_cast %107 : vector<16xf32> to vector<16x1xf32>
    %cst_26 = arith.constant 3.906250e-03 : f32
    %109 = vector.broadcast %cst_26 : f32 to vector<16x1xf32>
    %110 = arith.mulf %108, %109 : vector<16x1xf32>
    %c0_27 = arith.constant 0 : index
    %c0_28 = arith.constant 0 : index
    %111 = vector.load %arg9[%c0_27, %c0_28] : memref<16x2xf32, #tpu.memory_space<vmem>>, vector<16x2xf32>
    %112 = vector.broadcast %110 : vector<16x1xf32> to vector<16x2xf32>
    %113 = arith.mulf %111, %112 : vector<16x2xf32>
    %cst_29 = arith.constant dense<0.000000e+00> : vector<2xf32>
    %114 = vector.multi_reduction <add>, %113, %cst_29 [0] : vector<16x2xf32> to vector<2xf32>
    %115 = vector.shape_cast %114 : vector<2xf32> to vector<1x2xf32>
    %c0_30 = arith.constant 0 : index
    %c0_31 = arith.constant 0 : index
    %116 = vector.load %arg10[%c0_30, %c0_31] : memref<1x2xf32, #tpu.memory_space<vmem>>, vector<1x2xf32>
    %117 = arith.addf %115, %116 : vector<1x2xf32>
    %118 = arith.negf %117 : vector<1x2xf32>
    %119 = math.exp %118 : vector<1x2xf32>
    %cst_32 = arith.constant 1.000000e+00 : f32
    %120 = vector.broadcast %cst_32 : f32 to vector<1x2xf32>
    %121 = arith.addf %120, %119 : vector<1x2xf32>
    %122 = arith.divf %120, %121 : vector<1x2xf32>
    %123 = arith.mulf %117, %122 : vector<1x2xf32>
    %c0_33 = arith.constant 0 : index
    %c0_34 = arith.constant 0 : index
    %124 = vector.load %arg11[%c0_33, %c0_34] : memref<16x2xf32, #tpu.memory_space<vmem>>, vector<16x2xf32>
    %125 = vector.broadcast %123 : vector<1x2xf32> to vector<16x2xf32>
    %126 = arith.mulf %124, %125 : vector<16x2xf32>
    %cst_35 = arith.constant dense<0.000000e+00> : vector<16xf32>
    %127 = vector.multi_reduction <add>, %126, %cst_35 [1] : vector<16x2xf32> to vector<16xf32>
    %128 = vector.shape_cast %127 : vector<16xf32> to vector<16x1xf32>
    %c0_36 = arith.constant 0 : index
    %c0_37 = arith.constant 0 : index
    %129 = vector.load %arg12[%c0_36, %c0_37] : memref<16x1xf32, #tpu.memory_space<vmem>>, vector<16x1xf32>
    %130 = arith.addf %128, %129 : vector<16x1xf32>
    %131 = arith.negf %130 : vector<16x1xf32>
    %132 = math.exp %131 : vector<16x1xf32>
    %cst_38 = arith.constant 1.000000e+00 : f32
    %133 = vector.broadcast %cst_38 : f32 to vector<16x1xf32>
    %134 = arith.addf %133, %132 : vector<16x1xf32>
    %135 = arith.divf %133, %134 : vector<16x1xf32>
    %136 = vector.broadcast %135 : vector<16x1xf32> to vector<16x256xf32>
    %137 = arith.mulf %106, %136 : vector<16x256xf32>
    %c0_39 = arith.constant 0 : index
    %c0_40 = arith.constant 0 : index
    %138 = vector.load %arg13[%c0_39, %c0_40] : memref<8x16xf32, #tpu.memory_space<vmem>>, vector<8x16xf32>
    %cst_41 = arith.constant dense<0.000000e+00> : vector<8x256xf32>
    %139 = tpu.matmul %138, %137, %cst_41 {dimension_numbers = #tpu.dot_dimension_numbers<[1], [0], [0], [1], [0, 0, 1, 1], [], []>} : vector<8x16xf32>, vector<16x256xf32>, vector<8x256xf32> -> vector<8x256xf32>
    %c0_42 = arith.constant 0 : index
    %c0_43 = arith.constant 0 : index
    %140 = vector.load %arg14[%c0_42, %c0_43] : memref<8x1xf32, #tpu.memory_space<vmem>>, vector<8x1xf32>
    %141 = vector.broadcast %140 : vector<8x1xf32> to vector<8x256xf32>
    %142 = arith.mulf %139, %141 : vector<8x256xf32>
    %c0_44 = arith.constant 0 : index
    %c0_45 = arith.constant 0 : index
    %143 = vector.load %arg15[%c0_44, %c0_45] : memref<8x1xf32, #tpu.memory_space<vmem>>, vector<8x1xf32>
    %144 = vector.broadcast %143 : vector<8x1xf32> to vector<8x256xf32>
    %145 = arith.addf %142, %144 : vector<8x256xf32>
    %146 = arith.addf %145, %1 : vector<8x256xf32>
    %c0_46 = arith.constant 0 : index
    %c0_47 = arith.constant 0 : index
    %c0_48 = arith.constant 0 : index
    %147 = vector.load %arg16[%c0_46, %c0_47, %c0_48] : memref<1x8x256xf32, #tpu.memory_space<vmem>>, vector<1x8x256xf32>
    %148 = vector.shape_cast %147 : vector<1x8x256xf32> to vector<8x256xf32>
    %149 = vector.shape_cast %146 : vector<8x256xf32> to vector<1x8x256xf32>
    tpu.vector_store %arg16[%c0_46, %c0_47, %c0_48], %149 {strides = array<i32>} : memref<1x8x256xf32, #tpu.memory_space<vmem>>, vector<1x8x256xf32>,
    return
  }
  func.func @transform_0(%arg0: i32) -> (i32, i32, i32) {
    %c0_i32 = arith.constant 0 : i32
    %c0_i32_0 = arith.constant 0 : i32
    %c0_i32_1 = arith.constant 0 : i32
    return %arg0, %c0_i32, %c0_i32_0 : i32, i32, i32
  }
  func.func @transform_1(%arg0: i32) -> (i32, i32) {
    %c0_i32 = arith.constant 0 : i32
    %c0_i32_0 = arith.constant 0 : i32
    %c0_i32_1 = arith.constant 0 : i32
    return %c0_i32, %c0_i32_0 : i32, i32
  }
  func.func @transform_2(%arg0: i32) -> (i32, i32) {
    %c0_i32 = arith.constant 0 : i32
    %c0_i32_0 = arith.constant 0 : i32
    %c0_i32_1 = arith.constant 0 : i32
    return %c0_i32, %c0_i32_0 : i32, i32
  }
  func.func @transform_3(%arg0: i32) -> (i32, i32) {
    %c0_i32 = arith.constant 0 : i32
    %c0_i32_0 = arith.constant 0 : i32
    %c0_i32_1 = arith.constant 0 : i32
    return %c0_i32, %c0_i32_0 : i32, i32
  }
  func.func @transform_4(%arg0: i32) -> (i32, i32) {
    %c0_i32 = arith.constant 0 : i32
    %c0_i32_0 = arith.constant 0 : i32
    %c0_i32_1 = arith.constant 0 : i32
    return %c0_i32, %c0_i32_0 : i32, i32
  }
  func.func @transform_5(%arg0: i32) -> (i32, i32) {
    %c0_i32 = arith.constant 0 : i32
    %c0_i32_0 = arith.constant 0 : i32
    %c0_i32_1 = arith.constant 0 : i32
    return %c0_i32, %c0_i32_0 : i32, i32
  }
  func.func @transform_6(%arg0: i32) -> (i32, i32) {
    %c0_i32 = arith.constant 0 : i32
    %c0_i32_0 = arith.constant 0 : i32
    %c0_i32_1 = arith.constant 0 : i32
    return %c0_i32, %c0_i32_0 : i32, i32
  }
  func.func @transform_7(%arg0: i32) -> (i32, i32) {
    %c0_i32 = arith.constant 0 : i32
    %c0_i32_0 = arith.constant 0 : i32
    %c0_i32_1 = arith.constant 0 : i32
    return %c0_i32, %c0_i32_0 : i32, i32
  }
  func.func @transform_8(%arg0: i32) -> (i32, i32) {
    %c0_i32 = arith.constant 0 : i32
    %c0_i32_0 = arith.constant 0 : i32
    %c0_i32_1 = arith.constant 0 : i32
    return %c0_i32, %c0_i32_0 : i32, i32
  }
  func.func @transform_9(%arg0: i32) -> (i32, i32) {
    %c0_i32 = arith.constant 0 : i32
    %c0_i32_0 = arith.constant 0 : i32
    %c0_i32_1 = arith.constant 0 : i32
    return %c0_i32, %c0_i32_0 : i32, i32
  }
  func.func @transform_10(%arg0: i32) -> (i32, i32) {
    %c0_i32 = arith.constant 0 : i32
    %c0_i32_0 = arith.constant 0 : i32
    %c0_i32_1 = arith.constant 0 : i32
    return %c0_i32, %c0_i32_0 : i32, i32
  }
  func.func @transform_11(%arg0: i32) -> (i32, i32) {
    %c0_i32 = arith.constant 0 : i32
    %c0_i32_0 = arith.constant 0 : i32
    %c0_i32_1 = arith.constant 0 : i32
    return %c0_i32, %c0_i32_0 : i32, i32
  }
  func.func @transform_12(%arg0: i32) -> (i32, i32) {
    %c0_i32 = arith.constant 0 : i32
    %c0_i32_0 = arith.constant 0 : i32
    %c0_i32_1 = arith.constant 0 : i32
    return %c0_i32, %c0_i32_0 : i32, i32
  }
  func.func @transform_13(%arg0: i32) -> (i32, i32) {
    %c0_i32 = arith.constant 0 : i32
    %c0_i32_0 = arith.constant 0 : i32
    %c0_i32_1 = arith.constant 0 : i32
    return %c0_i32, %c0_i32_0 : i32, i32
  }
  func.func @transform_14(%arg0: i32) -> (i32, i32) {
    %c0_i32 = arith.constant 0 : i32
    %c0_i32_0 = arith.constant 0 : i32
    %c0_i32_1 = arith.constant 0 : i32
    return %c0_i32, %c0_i32_0 : i32, i32
  }
  func.func @transform_15(%arg0: i32) -> (i32, i32, i32) {
    %c0_i32 = arith.constant 0 : i32
    %c0_i32_0 = arith.constant 0 : i32
    %c0_i32_1 = arith.constant 0 : i32
    return %arg0, %c0_i32, %c0_i32_0 : i32, i32, i32
  }
}

</mosaic_0001>

<llo_original>
// kernel: tpu_custom_call.1
$region0: #{tpu_custom_call.1}
  #allocation0 [shape = 'u32[]', space=smem, size = 0x4, offset = 0x4, fixed_abs, tag = 'smem constant byte address 0x4 - core index']
  #allocation1 [shape = 'u32[144,128]{1,0:T(1,128)}', space=vmem, size = 0x12000, scoped, tag = 'internal scratch']
  #allocation2 [shape = 'f32[16,512]{1,0:T(8,128)}', space=vmem, size = 0x8000, scoped, tag = 'scratch operand']
  %s0 = inlined_call_operand.vmem [shape: f32[2,8,256], index: 0, kind: input, shape index: {}]
  %s1 = inlined_call_operand.vmem [shape: f32[9,256], index: 1, kind: input, shape index: {}]
  %s2 = inlined_call_operand.vmem [shape: f32[16,8], index: 2, kind: input, shape index: {}]
  %s3 = inlined_call_operand.vmem [shape: f32[16,1], index: 3, kind: input, shape index: {}]
  %s4 = inlined_call_operand.vmem [shape: f32[16,1], index: 4, kind: input, shape index: {}]
  %s5 = inlined_call_operand.vmem [shape: f32[16,9], index: 5, kind: input, shape index: {}]
  %s6 = inlined_call_operand.vmem [shape: f32[16,1], index: 6, kind: input, shape index: {}]
  %s7 = inlined_call_operand.vmem [shape: f32[16,1], index: 7, kind: input, shape index: {}]
  %s8 = inlined_call_operand.vmem [shape: f32[16,2], index: 8, kind: input, shape index: {}]
  %s9 = inlined_call_operand.vmem [shape: f32[1,2], index: 9, kind: input, shape index: {}]
  %s10 = inlined_call_operand.vmem [shape: f32[16,2], index: 10, kind: input, shape index: {}]
  %s11 = inlined_call_operand.vmem [shape: f32[16,1], index: 11, kind: input, shape index: {}]
  %s12 = inlined_call_operand.vmem [shape: f32[8,16], index: 12, kind: input, shape index: {}]
  %s13 = inlined_call_operand.vmem [shape: f32[8,1], index: 13, kind: input, shape index: {}]
  %s14 = inlined_call_operand.vmem [shape: f32[8,1], index: 14, kind: input, shape index: {}]
  %s15 = inlined_call_operand.hbm [shape: f32[2,8,256], index: 15, kind: output, shape index: {}]
  %s16 = sld [smem:[#allocation0]]
  $region93: #{tpu_custom_call.1} parent=0
    _
  %s18 = ssub.s32 1, %s16
  %s19 = scalar_select 0, %s18, %s16
  $region1: #{tpu_custom_call.1} parent=0
    #allocation3 [shape = 'u8[16384]{0}', space=vmem, size = 0x4000, scoped, tag = 'output window, operand 0']
    #allocation4 [shape = 's32[2]{0}', space=sflag, size = 0x8, scoped, tag = 'scoped memory for tpu_custom_call.1']
    %20 = vsyncpa [#allocation4], 0
    %s21 = scalar_lea.sflag [#allocation4], 1
    %22 = vsyncpa %s21, 0
    loop: start=0, step=1, limit=4
    $region2: #{tpu_custom_call.1} parent=1 // loop_pre_header
      _
    $region3: #{tpu_custom_call.1} parent=1 // loop_header
      %s24 = sphi 0, %s28
      %p25 = scmp.ge.s32.totalorder %s24, 4
      %s34 = sphi 0, %s36
      %s37 = sphi 0, %s34
      %s38 = sphi 0, %s37
      %s54 = sphi 0, %s38
      %s58 = sphi 0, %s58
      %s60 = sphi 0, %s58
      %s61 = sphi 0, %s60
      %s75 = sphi 0, %s61
      %s79 = sphi 0, %s79
      %s81 = sphi 0, %s79
      %s82 = sphi 0, %s81
      %s96 = sphi 0, %s82
      %s100 = sphi 0, %s100
      %s102 = sphi 0, %s100
      %s103 = sphi 0, %s102
      %s117 = sphi 0, %s103
      %s121 = sphi 0, %s121
      %s123 = sphi 0, %s121
      %s124 = sphi 0, %s123
      %s138 = sphi 0, %s124
      %s142 = sphi 0, %s142
      %s144 = sphi 0, %s142
      %s145 = sphi 0, %s144
      %s159 = sphi 0, %s145
      %s163 = sphi 0, %s163
      %s165 = sphi 0, %s163
      %s166 = sphi 0, %s165
      %s180 = sphi 0, %s166
      %s184 = sphi 0, %s184
      %s186 = sphi 0, %s184
      %s187 = sphi 0, %s186
      %s201 = sphi 0, %s187
      %s205 = sphi 0, %s205
      %s207 = sphi 0, %s205
      %s208 = sphi 0, %s207
      %s222 = sphi 0, %s208
      %s226 = sphi 0, %s226
      %s228 = sphi 0, %s226
      %s229 = sphi 0, %s228
      %s243 = sphi 0, %s229
      %s247 = sphi 0, %s247
      %s249 = sphi 0, %s247
      %s250 = sphi 0, %s249
      %s264 = sphi 0, %s250
      %s268 = sphi 0, %s268
      %s270 = sphi 0, %s268
      %s271 = sphi 0, %s270
      %s285 = sphi 0, %s271
      %s289 = sphi 0, %s289
      %s291 = sphi 0, %s289
      %s292 = sphi 0, %s291
      %s306 = sphi 0, %s292
      %s310 = sphi 0, %s310
      %s312 = sphi 0, %s310
      %s313 = sphi 0, %s312
      %s327 = sphi 0, %s313
      %s331 = sphi 0, %s331
      %s333 = sphi 0, %s331
      %s334 = sphi 0, %s333
      %s348 = sphi 0, %s334
      %s354 = sphi 0, %s356
      %s357 = sphi 0, %s354
      %s358 = sphi 0, %s357
      %s374 = sphi 0, %s358
    $region4: #{tpu_custom_call.1} parent=1 // loop_header_branch
      %27 = sbr.rel (%p25) target = $region8
    $region5: #{tpu_custom_call.1} parent=1 // loop_body
      %s29 = ssub.s32 %s24, 1
      %s30 = ssub.s32 %s24, 2
      %s31 = sadd.s32 %s24, 1
      %s32 = ssub.s32 %s24, %s31
      %p33 = scmp.eq.s32.totalorder %s32, 0
      %s35 = sadd.s32 %s34, 1
      %s36 = scalar_select %p33, %s34, %s35
      %p39 = pneg %p33
      %p40 = scmp.eq.s32.totalorder %s24, 1
      %p41 = por %p39, %p40
      %p42 = scmp.ne.s32.totalorder %s34, %s37
      %p43 = scmp.eq.s32.totalorder %s24, 0
      %p44 = por %p42, %p43
      %p45 = scmp.ne.s32.totalorder %s34, %s37
      %p46 = scmp.eq.s32.totalorder %s29, 1
      %p47 = por %p45, %p46
      %p48 = scmp.ne.s32.totalorder %s37, %s38
      %p49 = scmp.eq.s32.totalorder %s29, 0
      %p50 = por %p48, %p49
      %p51 = scmp.ne.s32.totalorder %s37, %s38
      %p52 = scmp.eq.s32.totalorder %s30, 1
      %p53 = por %p51, %p52
      %p55 = scmp.ne.s32.totalorder %s38, %s54
      %p56 = scmp.eq.s32.totalorder %s30, 0
      %p57 = por %p55, %p56
      %s59 = sadd.s32 %s58, 1
      %p62 = scmp.eq.s32.totalorder %s24, 1
      %p63 = scmp.ne.s32.totalorder %s58, %s60
      %p64 = scmp.eq.s32.totalorder %s24, 0
      %p65 = por %p63, %p64
      %p66 = scmp.ne.s32.totalorder %s58, %s60
      %p67 = scmp.eq.s32.totalorder %s29, 1
      %p68 = por %p66, %p67
      %p69 = scmp.ne.s32.totalorder %s60, %s61
      %p70 = scmp.eq.s32.totalorder %s29, 0
      %p71 = por %p69, %p70
      %p72 = scmp.ne.s32.totalorder %s60, %s61
      %p73 = scmp.eq.s32.totalorder %s30, 1
      %p74 = por %p72, %p73
      %p76 = scmp.ne.s32.totalorder %s61, %s75
      %p77 = scmp.eq.s32.totalorder %s30, 0
      %p78 = por %p76, %p77
      %s80 = sadd.s32 %s79, 1
      %p83 = scmp.eq.s32.totalorder %s24, 1
      %p84 = scmp.ne.s32.totalorder %s79, %s81
      %p85 = scmp.eq.s32.totalorder %s24, 0
      %p86 = por %p84, %p85
      %p87 = scmp.ne.s32.totalorder %s79, %s81
      %p88 = scmp.eq.s32.totalorder %s29, 1
      %p89 = por %p87, %p88
      %p90 = scmp.ne.s32.totalorder %s81, %s82
      %p91 = scmp.eq.s32.totalorder %s29, 0
      %p92 = por %p90, %p91
      %p93 = scmp.ne.s32.totalorder %s81, %s82
      %p94 = scmp.eq.s32.totalorder %s30, 1
      %p95 = por %p93, %p94
      %p97 = scmp.ne.s32.totalorder %s82, %s96
      %p98 = scmp.eq.s32.totalorder %s30, 0
      %p99 = por %p97, %p98
      %s101 = sadd.s32 %s100, 1
      %p104 = scmp.eq.s32.totalorder %s24, 1
      %p105 = scmp.ne.s32.totalorder %s100, %s102
      %p106 = scmp.eq.s32.totalorder %s24, 0
      %p107 = por %p105, %p106
      %p108 = scmp.ne.s32.totalorder %s100, %s102
      %p109 = scmp.eq.s32.totalorder %s29, 1
      %p110 = por %p108, %p109
      %p111 = scmp.ne.s32.totalorder %s102, %s103
      %p112 = scmp.eq.s32.totalorder %s29, 0
      %p113 = por %p111, %p112
      %p114 = scmp.ne.s32.totalorder %s102, %s103
      %p115 = scmp.eq.s32.totalorder %s30, 1
      %p116 = por %p114, %p115
      %p118 = scmp.ne.s32.totalorder %s103, %s117
      %p119 = scmp.eq.s32.totalorder %s30, 0
      %p120 = por %p118, %p119
      %s122 = sadd.s32 %s121, 1
      %p125 = scmp.eq.s32.totalorder %s24, 1
      %p126 = scmp.ne.s32.totalorder %s121, %s123
      %p127 = scmp.eq.s32.totalorder %s24, 0
      %p128 = por %p126, %p127
      %p129 = scmp.ne.s32.totalorder %s121, %s123
      %p130 = scmp.eq.s32.totalorder %s29, 1
      %p131 = por %p129, %p130
      %p132 = scmp.ne.s32.totalorder %s123, %s124
      %p133 = scmp.eq.s32.totalorder %s29, 0
      %p134 = por %p132, %p133
      %p135 = scmp.ne.s32.totalorder %s123, %s124
      %p136 = scmp.eq.s32.totalorder %s30, 1
      %p137 = por %p135, %p136
      %p139 = scmp.ne.s32.totalorder %s124, %s138
      %p140 = scmp.eq.s32.totalorder %s30, 0
      %p141 = por %p139, %p140
      %s143 = sadd.s32 %s142, 1
      %p146 = scmp.eq.s32.totalorder %s24, 1
      %p147 = scmp.ne.s32.totalorder %s142, %s144
      %p148 = scmp.eq.s32.totalorder %s24, 0
      %p149 = por %p147, %p148
      %p150 = scmp.ne.s32.totalorder %s142, %s144
      %p151 = scmp.eq.s32.totalorder %s29, 1
      %p152 = por %p150, %p151
      %p153 = scmp.ne.s32.totalorder %s144, %s145
      %p154 = scmp.eq.s32.totalorder %s29, 0
      %p155 = por %p153, %p154
      %p156 = scmp.ne.s32.totalorder %s144, %s145
      %p157 = scmp.eq.s32.totalorder %s30, 1
      %p158 = por %p156, %p157
      %p160 = scmp.ne.s32.totalorder %s145, %s159
      %p161 = scmp.eq.s32.totalorder %s30, 0
      %p162 = por %p160, %p161
      %s164 = sadd.s32 %s163, 1
      %p167 = scmp.eq.s32.totalorder %s24, 1
      %p168 = scmp.ne.s32.totalorder %s163, %s165
      %p169 = scmp.eq.s32.totalorder %s24, 0
      %p170 = por %p168, %p169
      %p171 = scmp.ne.s32.totalorder %s163, %s165
      %p172 = scmp.eq.s32.totalorder %s29, 1
      %p173 = por %p171, %p172
      %p174 = scmp.ne.s32.totalorder %s165, %s166
      %p175 = scmp.eq.s32.totalorder %s29, 0
      %p176 = por %p174, %p175
      %p177 = scmp.ne.s32.totalorder %s165, %s166
      %p178 = scmp.eq.s32.totalorder %s30, 1
      %p179 = por %p177, %p178
      %p181 = scmp.ne.s32.totalorder %s166, %s180
      %p182 = scmp.eq.s32.totalorder %s30, 0
      %p183 = por %p181, %p182
      %s185 = sadd.s32 %s184, 1
      %p188 = scmp.eq.s32.totalorder %s24, 1
      %p189 = scmp.ne.s32.totalorder %s184, %s186
      %p190 = scmp.eq.s32.totalorder %s24, 0
      %p191 = por %p189, %p190
      %p192 = scmp.ne.s32.totalorder %s184, %s186
      %p193 = scmp.eq.s32.totalorder %s29, 1
      %p194 = por %p192, %p193
      %p195 = scmp.ne.s32.totalorder %s186, %s187
      %p196 = scmp.eq.s32.totalorder %s29, 0
      %p197 = por %p195, %p196
      %p198 = scmp.ne.s32.totalorder %s186, %s187
      %p199 = scmp.eq.s32.totalorder %s30, 1
      %p200 = por %p198, %p199
      %p202 = scmp.ne.s32.totalorder %s187, %s201
      %p203 = scmp.eq.s32.totalorder %s30, 0
      %p204 = por %p202, %p203
      %s206 = sadd.s32 %s205, 1
      %p209 = scmp.eq.s32.totalorder %s24, 1
      %p210 = scmp.ne.s32.totalorder %s205, %s207
      %p211 = scmp.eq.s32.totalorder %s24, 0
      %p212 = por %p210, %p211
      %p213 = scmp.ne.s32.totalorder %s205, %s207
      %p214 = scmp.eq.s32.totalorder %s29, 1
      %p215 = por %p213, %p214
      %p216 = scmp.ne.s32.totalorder %s207, %s208
      %p217 = scmp.eq.s32.totalorder %s29, 0
      %p218 = por %p216, %p217
      %p219 = scmp.ne.s32.totalorder %s207, %s208
      %p220 = scmp.eq.s32.totalorder %s30, 1
      %p221 = por %p219, %p220
      %p223 = scmp.ne.s32.totalorder %s208, %s222
      %p224 = scmp.eq.s32.totalorder %s30, 0
      %p225 = por %p223, %p224
      %s227 = sadd.s32 %s226, 1
      %p230 = scmp.eq.s32.totalorder %s24, 1
      %p231 = scmp.ne.s32.totalorder %s226, %s228
      %p232 = scmp.eq.s32.totalorder %s24, 0
      %p233 = por %p231, %p232
      %p234 = scmp.ne.s32.totalorder %s226, %s228
      %p235 = scmp.eq.s32.totalorder %s29, 1
      %p236 = por %p234, %p235
      %p237 = scmp.ne.s32.totalorder %s228, %s229
      %p238 = scmp.eq.s32.totalorder %s29, 0
      %p239 = por %p237, %p238
      %p240 = scmp.ne.s32.totalorder %s228, %s229
      %p241 = scmp.eq.s32.totalorder %s30, 1
      %p242 = por %p240, %p241
      %p244 = scmp.ne.s32.totalorder %s229, %s243
      %p245 = scmp.eq.s32.totalorder %s30, 0
      %p246 = por %p244, %p245
      %s248 = sadd.s32 %s247, 1
      %p251 = scmp.eq.s32.totalorder %s24, 1
      %p252 = scmp.ne.s32.totalorder %s247, %s249
      %p253 = scmp.eq.s32.totalorder %s24, 0
      %p254 = por %p252, %p253
      %p255 = scmp.ne.s32.totalorder %s247, %s249
      %p256 = scmp.eq.s32.totalorder %s29, 1
      %p257 = por %p255, %p256
      %p258 = scmp.ne.s32.totalorder %s249, %s250
      %p259 = scmp.eq.s32.totalorder %s29, 0
      %p260 = por %p258, %p259
      %p261 = scmp.ne.s32.totalorder %s249, %s250
      %p262 = scmp.eq.s32.totalorder %s30, 1
      %p263 = por %p261, %p262
      %p265 = scmp.ne.s32.totalorder %s250, %s264
      %p266 = scmp.eq.s32.totalorder %s30, 0
      %p267 = por %p265, %p266
      %s269 = sadd.s32 %s268, 1
      %p272 = scmp.eq.s32.totalorder %s24, 1
      %p273 = scmp.ne.s32.totalorder %s268, %s270
      %p274 = scmp.eq.s32.totalorder %s24, 0
      %p275 = por %p273, %p274
      %p276 = scmp.ne.s32.totalorder %s268, %s270
      %p277 = scmp.eq.s32.totalorder %s29, 1
      %p278 = por %p276, %p277
      %p279 = scmp.ne.s32.totalorder %s270, %s271
      %p280 = scmp.eq.s32.totalorder %s29, 0
      %p281 = por %p279, %p280
      %p282 = scmp.ne.s32.totalorder %s270, %s271
      %p283 = scmp.eq.s32.totalorder %s30, 1
      %p284 = por %p282, %p283
      %p286 = scmp.ne.s32.totalorder %s271, %s285
      %p287 = scmp.eq.s32.totalorder %s30, 0
      %p288 = por %p286, %p287
      %s290 = sadd.s32 %s289, 1
      %p293 = scmp.eq.s32.totalorder %s24, 1
      %p294 = scmp.ne.s32.totalorder %s289, %s291
      %p295 = scmp.eq.s32.totalorder %s24, 0
      %p296 = por %p294, %p295
      %p297 = scmp.ne.s32.totalorder %s289, %s291
      %p298 = scmp.eq.s32.totalorder %s29, 1
      %p299 = por %p297, %p298
      %p300 = scmp.ne.s32.totalorder %s291, %s292
      %p301 = scmp.eq.s32.totalorder %s29, 0
      %p302 = por %p300, %p301
      %p303 = scmp.ne.s32.totalorder %s291, %s292
      %p304 = scmp.eq.s32.totalorder %s30, 1
      %p305 = por %p303, %p304
      %p307 = scmp.ne.s32.totalorder %s292, %s306
      %p308 = scmp.eq.s32.totalorder %s30, 0
      %p309 = por %p307, %p308
      %s311 = sadd.s32 %s310, 1
      %p314 = scmp.eq.s32.totalorder %s24, 1
      %p315 = scmp.ne.s32.totalorder %s310, %s312
      %p316 = scmp.eq.s32.totalorder %s24, 0
      %p317 = por %p315, %p316
      %p318 = scmp.ne.s32.totalorder %s310, %s312
      %p319 = scmp.eq.s32.totalorder %s29, 1
      %p320 = por %p318, %p319
      %p321 = scmp.ne.s32.totalorder %s312, %s313
      %p322 = scmp.eq.s32.totalorder %s29, 0
      %p323 = por %p321, %p322
      %p324 = scmp.ne.s32.totalorder %s312, %s313
      %p325 = scmp.eq.s32.totalorder %s30, 1
      %p326 = por %p324, %p325
      %p328 = scmp.ne.s32.totalorder %s313, %s327
      %p329 = scmp.eq.s32.totalorder %s30, 0
      %p330 = por %p328, %p329
      %s332 = sadd.s32 %s331, 1
      %p335 = scmp.eq.s32.totalorder %s24, 1
      %p336 = scmp.ne.s32.totalorder %s331, %s333
      %p337 = scmp.eq.s32.totalorder %s24, 0
      %p338 = por %p336, %p337
      %p339 = scmp.ne.s32.totalorder %s331, %s333
      %p340 = scmp.eq.s32.totalorder %s29, 1
      %p341 = por %p339, %p340
      %p342 = scmp.ne.s32.totalorder %s333, %s334
      %p343 = scmp.eq.s32.totalorder %s29, 0
      %p344 = por %p342, %p343
      %p345 = scmp.ne.s32.totalorder %s333, %s334
      %p346 = scmp.eq.s32.totalorder %s30, 1
      %p347 = por %p345, %p346
      %p349 = scmp.ne.s32.totalorder %s334, %s348
      %p350 = scmp.eq.s32.totalorder %s30, 0
      %p351 = por %p349, %p350
      %s352 = ssub.s32 %s24, %s31
      %p353 = scmp.eq.s32.totalorder %s352, 0
      %s355 = sadd.s32 %s354, 1
      %s356 = scalar_select %p353, %s354, %s355
      %p359 = pneg %p353
      %p360 = scmp.eq.s32.totalorder %s24, 1
      %p361 = por %p359, %p360
      %p362 = scmp.ne.s32.totalorder %s354, %s357
      %p363 = scmp.eq.s32.totalorder %s24, 0
      %p364 = por %p362, %p363
      %p365 = scmp.ne.s32.totalorder %s354, %s357
      %p366 = scmp.eq.s32.totalorder %s29, 1
      %p367 = por %p365, %p366
      %p368 = scmp.ne.s32.totalorder %s357, %s358
      %p369 = scmp.eq.s32.totalorder %s29, 0
      %p370 = por %p368, %p369
      %p371 = scmp.ne.s32.totalorder %s357, %s358
      %p372 = scmp.eq.s32.totalorder %s30, 1
      %p373 = por %p371, %p372
      %p375 = scmp.ne.s32.totalorder %s358, %s374
      %p376 = scmp.eq.s32.totalorder %s30, 0
      %p377 = por %p375, %p376
      %p378 = scmp.le.s32.totalorder 1, %s24
      %p379 = scmp.lt.s32.totalorder %s24, 3
      %p380 = pnand %p378, %p379
      %p381 = pneg %p380
      // Predicated region
      $region9: #{tpu_custom_call.1} parent=5 // pred_check
        _
      $region10: #{tpu_custom_call.1} parent=5 // pred_check_branch
        %383 = sbr.rel (%p380) target = $region12
      $region11: #{tpu_custom_call.1} parent=5 // pred_region
        %s384 = ssub.s32 %s24, 1
        // Predicated region
        $region13: #{tpu_custom_call.1} parent=11 // pred_check
          %p385 = pneg %p71
        $region14: #{tpu_custom_call.1} parent=11 // pred_check_branch
          %387 = sbr.rel (%p385) target = $region16
        $region15: #{tpu_custom_call.1} parent=11 // pred_region
          _
        $region16: #{tpu_custom_call.1} parent=11 // pred_fallthru
          _
        // Predicated region
        $region17: #{tpu_custom_call.1} parent=11 // pred_check
          %p388 = pneg %p92
        $region18: #{tpu_custom_call.1} parent=11 // pred_check_branch
          %390 = sbr.rel (%p388) target = $region20
        $region19: #{tpu_custom_call.1} parent=11 // pred_region
          _
        $region20: #{tpu_custom_call.1} parent=11 // pred_fallthru
          _
        // Predicated region
        $region21: #{tpu_custom_call.1} parent=11 // pred_check
          %p391 = pneg %p113
        $region22: #{tpu_custom_call.1} parent=11 // pred_check_branch
          %393 = sbr.rel (%p391) target = $region24
        $region23: #{tpu_custom_call.1} parent=11 // pred_region
          _
        $region24: #{tpu_custom_call.1} parent=11 // pred_fallthru
          _
        // Predicated region
        $region25: #{tpu_custom_call.1} parent=11 // pred_check
          %p394 = pneg %p134
        $region26: #{tpu_custom_call.1} parent=11 // pred_check_branch
          %396 = sbr.rel (%p394) target = $region28
        $region27: #{tpu_custom_call.1} parent=11 // pred_region
          _
        $region28: #{tpu_custom_call.1} parent=11 // pred_fallthru
          _
        // Predicated region
        $region29: #{tpu_custom_call.1} parent=11 // pred_check
          %p397 = pneg %p155
        $region30: #{tpu_custom_call.1} parent=11 // pred_check_branch
          %399 = sbr.rel (%p397) target = $region32
        $region31: #{tpu_custom_call.1} parent=11 // pred_region
          _
        $region32: #{tpu_custom_call.1} parent=11 // pred_fallthru
          _
        // Predicated region
        $region33: #{tpu_custom_call.1} parent=11 // pred_check
          %p400 = pneg %p176
        $region34: #{tpu_custom_call.1} parent=11 // pred_check_branch
          %402 = sbr.rel (%p400) target = $region36
        $region35: #{tpu_custom_call.1} parent=11 // pred_region
          _
        $region36: #{tpu_custom_call.1} parent=11 // pred_fallthru
          _
        // Predicated region
        $region37: #{tpu_custom_call.1} parent=11 // pred_check
          %p403 = pneg %p197
        $region38: #{tpu_custom_call.1} parent=11 // pred_check_branch
          %405 = sbr.rel (%p403) target = $region40
        $region39: #{tpu_custom_call.1} parent=11 // pred_region
          _
        $region40: #{tpu_custom_call.1} parent=11 // pred_fallthru
          _
        // Predicated region
        $region41: #{tpu_custom_call.1} parent=11 // pred_check
          %p406 = pneg %p218
        $region42: #{tpu_custom_call.1} parent=11 // pred_check_branch
          %408 = sbr.rel (%p406) target = $region44
        $region43: #{tpu_custom_call.1} parent=11 // pred_region
          _
        $region44: #{tpu_custom_call.1} parent=11 // pred_fallthru
          _
        // Predicated region
        $region45: #{tpu_custom_call.1} parent=11 // pred_check
          %p409 = pneg %p239
        $region46: #{tpu_custom_call.1} parent=11 // pred_check_branch
          %411 = sbr.rel (%p409) target = $region48
        $region47: #{tpu_custom_call.1} parent=11 // pred_region
          _
        $region48: #{tpu_custom_call.1} parent=11 // pred_fallthru
          _
        // Predicated region
        $region49: #{tpu_custom_call.1} parent=11 // pred_check
          %p412 = pneg %p260
        $region50: #{tpu_custom_call.1} parent=11 // pred_check_branch
          %414 = sbr.rel (%p412) target = $region52
        $region51: #{tpu_custom_call.1} parent=11 // pred_region
          _
        $region52: #{tpu_custom_call.1} parent=11 // pred_fallthru
          _
        // Predicated region
        $region53: #{tpu_custom_call.1} parent=11 // pred_check
          %p415 = pneg %p281
        $region54: #{tpu_custom_call.1} parent=11 // pred_check_branch
          %417 = sbr.rel (%p415) target = $region56
        $region55: #{tpu_custom_call.1} parent=11 // pred_region
          _
        $region56: #{tpu_custom_call.1} parent=11 // pred_fallthru
          _
        // Predicated region
        $region57: #{tpu_custom_call.1} parent=11 // pred_check
          %p418 = pneg %p302
        $region58: #{tpu_custom_call.1} parent=11 // pred_check_branch
          %420 = sbr.rel (%p418) target = $region60
        $region59: #{tpu_custom_call.1} parent=11 // pred_region
          _
        $region60: #{tpu_custom_call.1} parent=11 // pred_fallthru
          _
        // Predicated region
        $region61: #{tpu_custom_call.1} parent=11 // pred_check
          %p421 = pneg %p323
        $region62: #{tpu_custom_call.1} parent=11 // pred_check_branch
          %423 = sbr.rel (%p421) target = $region64
        $region63: #{tpu_custom_call.1} parent=11 // pred_region
          _
        $region64: #{tpu_custom_call.1} parent=11 // pred_fallthru
          _
        // Predicated region
        $region65: #{tpu_custom_call.1} parent=11 // pred_check
          %p424 = pneg %p344
        $region66: #{tpu_custom_call.1} parent=11 // pred_check_branch
          %426 = sbr.rel (%p424) target = $region68
        $region67: #{tpu_custom_call.1} parent=11 // pred_region
          _
        $region68: #{tpu_custom_call.1} parent=11 // pred_fallthru
          _
      $region12: #{tpu_custom_call.1} parent=5 // pred_fallthru
        _
      %p427 = scmp.lt.s32.totalorder %s24, 2
      // Predicated region
      $region69: #{tpu_custom_call.1} parent=5 // pred_check
        %p428 = pneg %p427
      $region70: #{tpu_custom_call.1} parent=5 // pred_check_branch
        %430 = sbr.rel (%p428) target = $region72
      $region71: #{tpu_custom_call.1} parent=5 // pred_region
        // Predicated region
        $region73: #{tpu_custom_call.1} parent=71 // pred_check
          %p431 = pneg %p44
        $region74: #{tpu_custom_call.1} parent=71 // pred_check_branch
          %433 = sbr.rel (%p431) target = $region76
        $region75: #{tpu_custom_call.1} parent=71 // pred_region
          %p434 = scmp.lt.s32.totalorder %s24, 1
          %s435 = scalar_select %p434, %s24, 1
          %s436 = smul.addr %s435, 2
          %s437 = smul.addr %s436, 8
          %s438 = scalar_lea.vmem %s0, %s437
        $region76: #{tpu_custom_call.1} parent=71 // pred_fallthru
          _
      $region72: #{tpu_custom_call.1} parent=5 // pred_fallthru
        _
      %p439 = scmp.le.s32.totalorder 1, %s24
      %p440 = scmp.lt.s32.totalorder %s24, 3
      %p441 = pnand %p439, %p440
      %p442 = pneg %p441
      // Predicated region
      $region77: #{tpu_custom_call.1} parent=5 // pred_check
        _
      $region78: #{tpu_custom_call.1} parent=5 // pred_check_branch
        %444 = sbr.rel (%p441) target = $region80
      $region79: #{tpu_custom_call.1} parent=5 // pred_region
        %s445 = ssub.s32 %s24, 1
        %p446 = scmp.lt.s32.totalorder %s29, 1
        %s447 = scalar_select %p446, %s29, 1
        %s448 = smul.addr %s447, 2
        %s449 = smul.addr %s448, 8
        %s450 = scalar_lea.vmem %s0, %s449
        %p451 = pneg %p50
        %p452 = pneg %p47
        %p453 = pneg %p71
        %p454 = pneg %p68
        %p455 = pneg %p92
        %p456 = pneg %p89
        %p457 = pneg %p113
        %p458 = pneg %p110
        %p459 = pneg %p134
        %p460 = pneg %p131
        %p461 = pneg %p155
        %p462 = pneg %p152
        %p463 = pneg %p176
        %p464 = pneg %p173
        %p465 = pneg %p197
        %p466 = pneg %p194
        %p467 = pneg %p218
        %p468 = pneg %p215
        %p469 = pneg %p239
        %p470 = pneg %p236
        %p471 = pneg %p260
        %p472 = pneg %p257
        %p473 = pneg %p281
        %p474 = pneg %p278
        %p475 = pneg %p302
        %p476 = pneg %p299
        %p477 = pneg %p323
        %p478 = pneg %p320
        %p479 = pneg %p344
        %p480 = pneg %p341
        %p481 = pneg %p370
        %p482 = pneg %p367
        %s483 = sand.u32 %s357, 1
        %s484 = scalar_lea.sflag [#allocation4], %s483
        %s485 = sand.u32 %s357, 1
        %s486 = smul.addr %s485, 16
        %s487 = scalar_lea.vmem [#allocation3], %s486
        %p488 = scmp.lt.s32.totalorder %s29, 1
        %s489 = scalar_select %p488, %s29, 1
        %s490 = smul.addr %s489, 2
        %s491 = smul.addr %s490, 8
        %s492 = scalar_lea.vmem %s0, %s491
        %v493 = vld [vmem:[%s492] sm:$0xff]
        %v494 = vld [vmem:[%s492 + $0x8] sm:$0xff]
        %v495 = vld [vmem:[%s2] sm:$0xff]
        %v496 = vld [vmem:[%s2 + $0x8] sm:$0xff]
        %vm497 = vcmask 64512
        %v499 = vsel %vm497, %v495, 0
        %v502 = vsel %vm497, %v496, 0
        %504 = vmatprep.subr.mxu0 %v494
        %505 = vmatpush1.msra.mxu0 %v493
        %506 = vmatprep.subr.mxu0 0.0
        %507 = vmatpush1.msra.mxu0 0.0
        %508 = vmatprep.subr.mxu0 0.0
        %509 = vmatpush1.msra.mxu0 0.0
        %510 = vmatprep.subr.mxu0 0.0
        %511 = vmatpush1.msra.mxu0 0.0
        %512 = vmatprep.subr.mxu0 0.0
        %513 = vmatpush1.msra.mxu0 0.0
        %514 = vmatprep.subr.mxu0 0.0
        %515 = vmatpush1.msra.mxu0 0.0
        %516 = vmatprep.subr.mxu0 0.0
        %517 = vmatpush1.msra.mxu0 0.0
        %518 = vmatprep.subr.mxu0 0.0
        %519 = vmatpush1.msra.mxu0 0.0
        %520 = vmatprep.subr.mxu0 0.0
        %521 = vmatpush1.msra.mxu0 0.0
        %522 = vmatprep.subr.mxu0 0.0
        %523 = vmatpush1.msra.mxu0 0.0
        %524 = vmatprep.subr.mxu0 0.0
        %525 = vmatpush1.msra.mxu0 0.0
        %526 = vmatprep.subr.mxu0 0.0
        %527 = vmatpush1.msra.mxu0 0.0
        %528 = vmatprep.subr.mxu0 0.0
        %529 = vmatpush1.msra.mxu0 0.0
        %530 = vmatprep.subr.mxu0 0.0
        %531 = vmatpush1.msra.mxu0 0.0
        %532 = vmatprep.subr.mxu0 0.0
        %533 = vmatpush1.msra.mxu0 0.0
        %534 = vmatprep.subr.mxu0 0.0
        %535 = vmatpush1.msra.mxu0 0.0
        %536 = vmatprep.subr.mxu0 0.0
        %537 = vmatpush1.msra.mxu0 0.0
        %538 = vmatprep.subr.mxu0 0.0
        %539 = vmatpush1.msra.mxu0 0.0
        %540 = vmatprep.subr.mxu0 0.0
        %541 = vmatpush1.msra.mxu0 0.0
        %542 = vmatprep.subr.mxu0 0.0
        %543 = vmatpush1.msra.mxu0 0.0
        %544 = vmatprep.subr.mxu0 0.0
        %545 = vmatpush1.msra.mxu0 0.0
        %546 = vmatprep.subr.mxu0 0.0
        %547 = vmatpush1.msra.mxu0 0.0
        %548 = vmatprep.subr.mxu0 0.0
        %549 = vmatpush1.msra.mxu0 0.0
        %550 = vmatprep.subr.mxu0 0.0
        %551 = vmatpush1.msra.mxu0 0.0
        %552 = vmatprep.subr.mxu0 0.0
        %553 = vmatpush1.msra.mxu0 0.0
        %554 = vmatprep.subr.mxu0 0.0
        %555 = vmatpush1.msra.mxu0 0.0
        %556 = vmatprep.subr.mxu0 0.0
        %557 = vmatpush1.msra.mxu0 0.0
        %558 = vmatprep.subr.mxu0 0.0
        %559 = vmatpush1.msra.mxu0 0.0
        %560 = vmatprep.subr.mxu0 0.0
        %561 = vmatpush1.msra.mxu0 0.0
        %562 = vmatprep.subr.mxu0 0.0
        %563 = vmatpush1.msra.mxu0 0.0
        %564 = vmatprep.subr.mxu0 0.0
        %565 = vmatpush1.msra.mxu0 0.0
        %566 = vmatprep.subr.mxu0 0.0
        %567 = vmatpush1.msra.mxu0 0.0
        %568 = vmatprep.mubr.f32.mxu0 0.0
        %569 = vmatmul.mubr.f32.gmra.mrb[0].mxu0 %v499
        %v570 = vpop.f32.mrb[0].mxu0
        %v571 = vadd.f32 0.0, %v570
        %v572 = vpop.f32.mrb[0].mxu0
        %v573 = vadd.f32 0.0, %v572
        %574 = vmatprep.mubr.f32.mxu0 0.0
        %575 = vmatmul.mubr.f32.gmra.mrb[0].mxu0 %v502
        %v576 = vpop.f32.mrb[0].mxu0
        %v577 = vadd.f32 0.0, %v576
        %v578 = vpop.f32.mrb[0].mxu0
        %v579 = vadd.f32 0.0, %v578
        %580 = vdwg.mxu0
        %v581 = vld [vmem:[%s3] sm:$0xff]
        %v582 = vld [vmem:[%s3 + $0x8] sm:$0xff]
        %584 = vset.pattern.permute.xlu0 0
        %585 = vperm.xlu0 %584, %v581
        %v586 = vpop.permute.xlu0 %585
        %589 = vset.pattern.permute.xlu0 0
        %590 = vperm.xlu0 %589, %v582
        %v591 = vpop.permute.xlu0 %590
        %v593 = vmul.f32 %v571, %v586
        %v594 = vmul.f32 %v573, %v586
        %v595 = vmul.f32 %v577, %v591
        %v596 = vmul.f32 %v579, %v591
        %v597 = vld [vmem:[%s4] sm:$0xff]
        %v598 = vld [vmem:[%s4 + $0x8] sm:$0xff]
        %600 = vset.pattern.permute.xlu0 0
        %601 = vperm.xlu0 %600, %v597
        %v602 = vpop.permute.xlu0 %601
        %605 = vset.pattern.permute.xlu0 0
        %606 = vperm.xlu0 %605, %v598
        %v607 = vpop.permute.xlu0 %606
        %v609 = vadd.f32 %v593, %v602
        %v610 = vadd.f32 %v594, %v602
        %v611 = vadd.f32 %v595, %v607
        %v612 = vadd.f32 %v596, %v607
        %v613 = vxor.u32 %v609, 2147483648
        %v614 = vxor.u32 %v610, 2147483648
        %v615 = vxor.u32 %v611, 2147483648
        %v616 = vxor.u32 %v612, 2147483648
        %v617 = vmul.f32 %v613, 1.442695
        %v618 = vpow.pop %v617
        %v619 = vmul.f32 %v614, 1.442695
        %v620 = vpow.pop %v619
        %v621 = vmul.f32 %v615, 1.442695
        %v622 = vpow.pop %v621
        %v623 = vmul.f32 %v616, 1.442695
        %v624 = vpow.pop %v623
        %v625 = vadd.f32 %v618, 1.0
        %v626 = vadd.f32 %v620, 1.0
        %v627 = vadd.f32 %v622, 1.0
        %v628 = vadd.f32 %v624, 1.0
        %v629 = vrcp.pop %v625
        %v630 = vmul.f32 1.0, %v629
        %v631 = vrcp.pop %v626
        %v632 = vmul.f32 1.0, %v631
        %v633 = vrcp.pop %v627
        %v634 = vmul.f32 1.0, %v633
        %v635 = vrcp.pop %v628
        %v636 = vmul.f32 1.0, %v635
        %v637 = vmul.f32 %v609, %v630
        %v638 = vmul.f32 %v610, %v632
        %v639 = vmul.f32 %v611, %v634
        %v640 = vmul.f32 %v612, %v636
        %641 = vst [vmem:[#allocation2] sm:$0xff] 0.0
        %642 = vst [vmem:[#allocation2 + $0x8] sm:$0xff] 0.0
        %643 = vst [vmem:[#allocation2 + $0x10] sm:$0xff] 0.0
        %644 = vst [vmem:[#allocation2 + $0x18] sm:$0xff] 0.0
        %645 = vst [vmem:[#allocation2 + $0x20] sm:$0xff] 0.0
        %646 = vst [vmem:[#allocation2 + $0x28] sm:$0xff] 0.0
        %647 = vst [vmem:[#allocation2 + $0x30] sm:$0xff] 0.0
        %648 = vst [vmem:[#allocation2 + $0x38] sm:$0xff] 0.0
        %649 = vst [vmem:[#allocation2 + $0x8] sm:$0xff] %v637
        %650 = vst [vmem:[#allocation2 + $0x10] sm:$0xff] %v638
        %651 = vst [vmem:[#allocation2 + $0x28] sm:$0xff] %v639
        %652 = vst [vmem:[#allocation2 + $0x30] sm:$0xff] %v640
        %v653 = vld [vmem:[#allocation2] sm:$0xff]
        %v654 = vld [vmem:[#allocation2 + $0x8] sm:$0xff]
        %v655 = vld [vmem:[#allocation2 + $0x10] sm:$0xff]
        %v656 = vld [vmem:[#allocation2 + $0x18] sm:$0xff]
        %v657 = vld [vmem:[#allocation2 + $0x20] sm:$0xff]
        %v658 = vld [vmem:[#allocation2 + $0x28] sm:$0xff]
        %v659 = vld [vmem:[#allocation2 + $0x30] sm:$0xff]
        %v660 = vld [vmem:[#allocation2 + $0x38] sm:$0xff]
        %v661 = vld [vmem:[%s5] sm:$0xff]
        %v662 = vld [vmem:[%s5 + $0x8] sm:$0xff]
        %v663 = vld [vmem:[%s1] sm:$0xff]
        %v664 = vld [vmem:[%s1 + $0x8] sm:$0xff]
        %v665 = vld [vmem:[%s1 + $0x10] sm:$0x1]
        %v666 = vld [vmem:[%s1 + $0x18] sm:$0x1]
        %v667 = vlaneseq
        %v668 = vshrl.u32 %v667, 7
        %v669 = vsub.s32 0, %v668
        %v670 = vrot.slane %v663, %v669
        %v671 = vlaneseq
        %v672 = vshrl.u32 %v671, 7
        %v673 = vsub.s32 0, %v672
        %v674 = vrot.slane %v664, %v673
        %677 = vrot.lane.b32.xlu0 %v670, 111
        %v678 = vpop.permute.xlu0 %677
        %679 = vrot.lane.b32.xlu0 %v674, 111
        %v680 = vpop.permute.xlu0 %679
        %vm681 = vcmask 908288
        %v682 = vsel %vm681, %v678, %v680
        %v686 = vmul.f32 %v653, %v678
        %v687 = vmul.f32 %v654, %v682
        %v688 = vmul.f32 %v655, %v680
        %v689 = vmul.f32 %v657, %v678
        %v690 = vmul.f32 %v658, %v682
        %v691 = vmul.f32 %v659, %v680
        %693 = vset.pattern.permute.xlu0 0
        %694 = vperm.xlu0 %693, %v661
        %v695 = vpop.permute.xlu0 %694
        %698 = vset.pattern.permute.xlu0 0
        %699 = vperm.xlu0 %698, %v662
        %v700 = vpop.permute.xlu0 %699
        %v702 = vmul.f32 %v695, %v686
        %v703 = vmul.f32 %v695, %v687
        %v704 = vmul.f32 %v695, %v688
        %v705 = vmul.f32 %v700, %v689
        %v706 = vmul.f32 %v700, %v690
        %v707 = vmul.f32 %v700, %v691
        %v708 = vadd.f32 %v702, 0.0
        %v709 = vadd.f32 %v703, 0.0
        %v710 = vadd.f32 %v704, 0.0
        %v711 = vadd.f32 %v705, 0.0
        %v712 = vadd.f32 %v706, 0.0
        %v713 = vadd.f32 %v707, 0.0
        %v714 = vlaneseq
        %v715 = vshrl.u32 %v714, 7
        %v716 = vsub.s32 1, %v715
        %v717 = vrot.slane %v663, %v716
        %v718 = vlaneseq
        %v719 = vshrl.u32 %v718, 7
        %v720 = vsub.s32 1, %v719
        %v721 = vrot.slane %v664, %v720
        %724 = vrot.lane.b32.xlu0 %v717, 112
        %v725 = vpop.permute.xlu0 %724
        %726 = vrot.lane.b32.xlu0 %v721, 112
        %v727 = vpop.permute.xlu0 %726
        %vm728 = vcmask 916480
        %v729 = vsel %vm728, %v725, %v727
        %v733 = vmul.f32 %v653, %v725
        %v734 = vmul.f32 %v654, %v729
        %v735 = vmul.f32 %v655, %v727
        %v736 = vmul.f32 %v657, %v725
        %v737 = vmul.f32 %v658, %v729
        %v738 = vmul.f32 %v659, %v727
        %739 = vset.pattern.permute.xlu0 1
        %740 = vperm.xlu0 %739, %v661
        %v741 = vpop.permute.xlu0 %740
        %743 = vset.pattern.permute.xlu0 1
        %744 = vperm.xlu0 %743, %v662
        %v745 = vpop.permute.xlu0 %744
        %v747 = vmul.f32 %v741, %v733
        %v748 = vmul.f32 %v741, %v734
        %v749 = vmul.f32 %v741, %v735
        %v750 = vmul.f32 %v745, %v736
        %v751 = vmul.f32 %v745, %v737
        %v752 = vmul.f32 %v745, %v738
        %759 = vrot.lane.b32.xlu0 %v747, 127
        %v760 = vpop.permute.xlu0 %759
        %761 = vrot.lane.b32.xlu0 %v748, 127
        %v762 = vpop.permute.xlu0 %761
        %763 = vrot.lane.b32.xlu0 %v749, 127
        %v764 = vpop.permute.xlu0 %763
        %765 = vrot.lane.b32.xlu0 %v750, 127
        %v766 = vpop.permute.xlu0 %765
        %767 = vrot.lane.b32.xlu0 %v751, 127
        %v768 = vpop.permute.xlu0 %767
        %769 = vrot.lane.b32.xlu0 %v752, 127
        %v770 = vpop.permute.xlu0 %769
        %vm771 = vcmask 1039360
        %v772 = vsel %vm771, %v760, %v762
        %v773 = vsel %vm771, %v762, %v764
        %v774 = vsel %vm771, %v766, %v768
        %v775 = vsel %vm771, %v768, %v770
        %v782 = vadd.f32 %v708, %v772
        %v783 = vadd.f32 %v709, %v773
        %v784 = vadd.f32 %v710, %v764
        %v785 = vadd.f32 %v711, %v774
        %v786 = vadd.f32 %v712, %v775
        %v787 = vadd.f32 %v713, %v770
        %v788 = vlaneseq
        %v789 = vshrl.u32 %v788, 7
        %v790 = vsub.s32 2, %v789
        %v791 = vrot.slane %v663, %v790
        %v792 = vlaneseq
        %v793 = vshrl.u32 %v792, 7
        %v794 = vsub.s32 2, %v793
        %v795 = vrot.slane %v664, %v794
        %798 = vrot.lane.b32.xlu0 %v791, 113
        %v799 = vpop.permute.xlu0 %798
        %800 = vrot.lane.b32.xlu0 %v795, 113
        %v801 = vpop.permute.xlu0 %800
        %vm802 = vcmask 924672
        %v803 = vsel %vm802, %v799, %v801
        %v807 = vmul.f32 %v653, %v799
        %v808 = vmul.f32 %v654, %v803
        %v809 = vmul.f32 %v655, %v801
        %v810 = vmul.f32 %v657, %v799
        %v811 = vmul.f32 %v658, %v803
        %v812 = vmul.f32 %v659, %v801
        %813 = vset.pattern.permute.xlu0 2
        %814 = vperm.xlu0 %813, %v661
        %v815 = vpop.permute.xlu0 %814
        %817 = vset.pattern.permute.xlu0 2
        %818 = vperm.xlu0 %817, %v662
        %v819 = vpop.permute.xlu0 %818
        %v821 = vmul.f32 %v815, %v807
        %v822 = vmul.f32 %v815, %v808
        %v823 = vmul.f32 %v815, %v809
        %v824 = vmul.f32 %v819, %v810
        %v825 = vmul.f32 %v819, %v811
        %v826 = vmul.f32 %v819, %v812
        %833 = vrot.lane.b32.xlu0 %v821, 126
        %v834 = vpop.permute.xlu0 %833
        %835 = vrot.lane.b32.xlu0 %v822, 126
        %v836 = vpop.permute.xlu0 %835
        %837 = vrot.lane.b32.xlu0 %v823, 126
        %v838 = vpop.permute.xlu0 %837
        %839 = vrot.lane.b32.xlu0 %v824, 126
        %v840 = vpop.permute.xlu0 %839
        %841 = vrot.lane.b32.xlu0 %v825, 126
        %v842 = vpop.permute.xlu0 %841
        %843 = vrot.lane.b32.xlu0 %v826, 126
        %v844 = vpop.permute.xlu0 %843
        %vm845 = vcmask 1031168
        %v846 = vsel %vm845, %v834, %v836
        %v847 = vsel %vm845, %v836, %v838
        %v848 = vsel %vm845, %v840, %v842
        %v849 = vsel %vm845, %v842, %v844
        %v856 = vadd.f32 %v782, %v846
        %v857 = vadd.f32 %v783, %v847
        %v858 = vadd.f32 %v784, %v838
        %v859 = vadd.f32 %v785, %v848
        %v860 = vadd.f32 %v786, %v849
        %v861 = vadd.f32 %v787, %v844
        %v862 = vlaneseq
        %v863 = vshrl.u32 %v862, 7
        %v864 = vsub.s32 3, %v863
        %v865 = vrot.slane %v663, %v864
        %v866 = vlaneseq
        %v867 = vshrl.u32 %v866, 7
        %v868 = vsub.s32 3, %v867
        %v869 = vrot.slane %v664, %v868
        %872 = vrot.lane.b32.xlu0 %v865, 127
        %v873 = vpop.permute.xlu0 %872
        %874 = vrot.lane.b32.xlu0 %v869, 127
        %v875 = vpop.permute.xlu0 %874
        %v876 = vsel %vm771, %v873, %v875
        %v880 = vmul.f32 %v653, %v873
        %v881 = vmul.f32 %v654, %v876
        %v882 = vmul.f32 %v655, %v875
        %v883 = vmul.f32 %v657, %v873
        %v884 = vmul.f32 %v658, %v876
        %v885 = vmul.f32 %v659, %v875
        %886 = vset.pattern.permute.xlu0 3
        %887 = vperm.xlu0 %886, %v661
        %v888 = vpop.permute.xlu0 %887
        %890 = vset.pattern.permute.xlu0 3
        %891 = vperm.xlu0 %890, %v662
        %v892 = vpop.permute.xlu0 %891
        %v894 = vmul.f32 %v888, %v880
        %v895 = vmul.f32 %v888, %v881
        %v896 = vmul.f32 %v888, %v882
        %v897 = vmul.f32 %v892, %v883
        %v898 = vmul.f32 %v892, %v884
        %v899 = vmul.f32 %v892, %v885
        %906 = vrot.lane.b32.xlu0 %v894, 112
        %v907 = vpop.permute.xlu0 %906
        %908 = vrot.lane.b32.xlu0 %v895, 112
        %v909 = vpop.permute.xlu0 %908
        %910 = vrot.lane.b32.xlu0 %v896, 112
        %v911 = vpop.permute.xlu0 %910
        %912 = vrot.lane.b32.xlu0 %v897, 112
        %v913 = vpop.permute.xlu0 %912
        %914 = vrot.lane.b32.xlu0 %v898, 112
        %v915 = vpop.permute.xlu0 %914
        %916 = vrot.lane.b32.xlu0 %v899, 112
        %v917 = vpop.permute.xlu0 %916
        %v918 = vsel %vm728, %v907, %v909
        %v919 = vsel %vm728, %v909, %v911
        %v920 = vsel %vm728, %v913, %v915
        %v921 = vsel %vm728, %v915, %v917
        %v928 = vadd.f32 %v856, %v918
        %v929 = vadd.f32 %v857, %v919
        %v930 = vadd.f32 %v858, %v911
        %v931 = vadd.f32 %v859, %v920
        %v932 = vadd.f32 %v860, %v921
        %v933 = vadd.f32 %v861, %v917
        %v934 = vlaneseq
        %v935 = vshrl.u32 %v934, 7
        %v936 = vsub.s32 4, %v935
        %v937 = vrot.slane %v663, %v936
        %v938 = vlaneseq
        %v939 = vshrl.u32 %v938, 7
        %v940 = vsub.s32 4, %v939
        %v941 = vrot.slane %v664, %v940
        %v942 = vmul.f32 %v654, %v937
        %v943 = vmul.f32 %v655, %v941
        %v944 = vmul.f32 %v658, %v937
        %v945 = vmul.f32 %v659, %v941
        %946 = vset.pattern.permute.xlu0 4
        %947 = vperm.xlu0 %946, %v661
        %v948 = vpop.permute.xlu0 %947
        %950 = vset.pattern.permute.xlu0 4
        %951 = vperm.xlu0 %950, %v662
        %v952 = vpop.permute.xlu0 %951
        %v954 = vmul.f32 %v948, %v942
        %v955 = vmul.f32 %v948, %v943
        %v956 = vmul.f32 %v952, %v944
        %v957 = vmul.f32 %v952, %v945
        %962 = vrot.lane.b32.xlu0 %v954, 111
        %v963 = vpop.permute.xlu0 %962
        %964 = vrot.lane.b32.xlu0 %v955, 111
        %v965 = vpop.permute.xlu0 %964
        %966 = vrot.lane.b32.xlu0 %v956, 111
        %v967 = vpop.permute.xlu0 %966
        %968 = vrot.lane.b32.xlu0 %v957, 111
        %v969 = vpop.permute.xlu0 %968
        %v970 = vsel %vm681, %v963, %v965
        %v971 = vsel %vm681, %v967, %v969
        %v978 = vadd.f32 %v928, %v963
        %v979 = vadd.f32 %v929, %v970
        %v980 = vadd.f32 %v930, %v965
        %v981 = vadd.f32 %v931, %v967
        %v982 = vadd.f32 %v932, %v971
        %v983 = vadd.f32 %v933, %v969
        %v984 = vlaneseq
        %v985 = vshrl.u32 %v984, 7
        %v986 = vsub.s32 5, %v985
        %v987 = vrot.slane %v663, %v986
        %v988 = vlaneseq
        %v989 = vshrl.u32 %v988, 7
        %v990 = vsub.s32 5, %v989
        %v991 = vrot.slane %v664, %v990
        %994 = vrot.lane.b32.xlu0 %v987, 1
        %v995 = vpop.permute.xlu0 %994
        %996 = vrot.lane.b32.xlu0 %v991, 1
        %v997 = vpop.permute.xlu0 %996
        %vm998 = vcmask 7168
        %v999 = vsel %vm998, %v995, %v997
        %v1003 = vmul.f32 %v654, %v995
        %v1004 = vmul.f32 %v655, %v999
        %v1005 = vmul.f32 %v656, %v997
        %v1006 = vmul.f32 %v658, %v995
        %v1007 = vmul.f32 %v659, %v999
        %v1008 = vmul.f32 %v660, %v997
        %1009 = vset.pattern.permute.xlu0 5
        %1010 = vperm.xlu0 %1009, %v661
        %v1011 = vpop.permute.xlu0 %1010
        %1013 = vset.pattern.permute.xlu0 5
        %1014 = vperm.xlu0 %1013, %v662
        %v1015 = vpop.permute.xlu0 %1014
        %v1017 = vmul.f32 %v1011, %v1003
        %v1018 = vmul.f32 %v1011, %v1004
        %v1019 = vmul.f32 %v1011, %v1005
        %v1020 = vmul.f32 %v1015, %v1006
        %v1021 = vmul.f32 %v1015, %v1007
        %v1022 = vmul.f32 %v1015, %v1008
        %1029 = vrot.lane.b32.xlu0 %v1017, 110
        %v1030 = vpop.permute.xlu0 %1029
        %1031 = vrot.lane.b32.xlu0 %v1018, 110
        %v1032 = vpop.permute.xlu0 %1031
        %1033 = vrot.lane.b32.xlu0 %v1019, 110
        %v1034 = vpop.permute.xlu0 %1033
        %1035 = vrot.lane.b32.xlu0 %v1020, 110
        %v1036 = vpop.permute.xlu0 %1035
        %1037 = vrot.lane.b32.xlu0 %v1021, 110
        %v1038 = vpop.permute.xlu0 %1037
        %1039 = vrot.lane.b32.xlu0 %v1022, 110
        %v1040 = vpop.permute.xlu0 %1039
        %vm1041 = vcmask 900096
        %v1042 = vsel %vm1041, %v1030, %v1032
        %v1043 = vsel %vm1041, %v1032, %v1034
        %v1044 = vsel %vm1041, %v1036, %v1038
        %v1045 = vsel %vm1041, %v1038, %v1040
        %v1052 = vadd.f32 %v978, %v1030
        %v1053 = vadd.f32 %v979, %v1042
        %v1054 = vadd.f32 %v980, %v1043
        %v1055 = vadd.f32 %v981, %v1036
        %v1056 = vadd.f32 %v982, %v1044
        %v1057 = vadd.f32 %v983, %v1045
        %v1058 = vlaneseq
        %v1059 = vshrl.u32 %v1058, 7
        %v1060 = vsub.s32 6, %v1059
        %v1061 = vrot.slane %v663, %v1060
        %v1062 = vlaneseq
        %v1063 = vshrl.u32 %v1062, 7
        %v1064 = vsub.s32 6, %v1063
        %v1065 = vrot.slane %v664, %v1064
        %1068 = vrot.lane.b32.xlu0 %v1061, 15
        %v1069 = vpop.permute.xlu0 %1068
        %1070 = vrot.lane.b32.xlu0 %v1065, 15
        %v1071 = vpop.permute.xlu0 %1070
        %vm1072 = vcmask 121856
        %v1073 = vsel %vm1072, %v1069, %v1071
        %v1077 = vmul.f32 %v654, %v1069
        %v1078 = vmul.f32 %v655, %v1073
        %v1079 = vmul.f32 %v656, %v1071
        %v1080 = vmul.f32 %v658, %v1069
        %v1081 = vmul.f32 %v659, %v1073
        %v1082 = vmul.f32 %v660, %v1071
        %1083 = vset.pattern.permute.xlu0 6
        %1084 = vperm.xlu0 %1083, %v661
        %v1085 = vpop.permute.xlu0 %1084
        %1087 = vset.pattern.permute.xlu0 6
        %1088 = vperm.xlu0 %1087, %v662
        %v1089 = vpop.permute.xlu0 %1088
        %v1091 = vmul.f32 %v1085, %v1077
        %v1092 = vmul.f32 %v1085, %v1078
        %v1093 = vmul.f32 %v1085, %v1079
        %v1094 = vmul.f32 %v1089, %v1080
        %v1095 = vmul.f32 %v1089, %v1081
        %v1096 = vmul.f32 %v1089, %v1082
        %1103 = vrot.lane.b32.xlu0 %v1091, 96
        %v1104 = vpop.permute.xlu0 %1103
        %1105 = vrot.lane.b32.xlu0 %v1092, 96
        %v1106 = vpop.permute.xlu0 %1105
        %1107 = vrot.lane.b32.xlu0 %v1093, 96
        %v1108 = vpop.permute.xlu0 %1107
        %1109 = vrot.lane.b32.xlu0 %v1094, 96
        %v1110 = vpop.permute.xlu0 %1109
        %1111 = vrot.lane.b32.xlu0 %v1095, 96
        %v1112 = vpop.permute.xlu0 %1111
        %1113 = vrot.lane.b32.xlu0 %v1096, 96
        %v1114 = vpop.permute.xlu0 %1113
        %vm1115 = vcmask 785408
        %v1116 = vsel %vm1115, %v1104, %v1106
        %v1117 = vsel %vm1115, %v1106, %v1108
        %v1118 = vsel %vm1115, %v1110, %v1112
        %v1119 = vsel %vm1115, %v1112, %v1114
        %v1126 = vadd.f32 %v1052, %v1104
        %v1127 = vadd.f32 %v1053, %v1116
        %v1128 = vadd.f32 %v1054, %v1117
        %v1129 = vadd.f32 %v1055, %v1110
        %v1130 = vadd.f32 %v1056, %v1118
        %v1131 = vadd.f32 %v1057, %v1119
        %v1132 = vlaneseq
        %v1133 = vshrl.u32 %v1132, 7
        %v1134 = vsub.s32 7, %v1133
        %v1135 = vrot.slane %v663, %v1134
        %v1136 = vlaneseq
        %v1137 = vshrl.u32 %v1136, 7
        %v1138 = vsub.s32 7, %v1137
        %v1139 = vrot.slane %v664, %v1138
        %1142 = vrot.lane.b32.xlu0 %v1135, 16
        %v1143 = vpop.permute.xlu0 %1142
        %1144 = vrot.lane.b32.xlu0 %v1139, 16
        %v1145 = vpop.permute.xlu0 %1144
        %vm1146 = vcmask 130048
        %v1147 = vsel %vm1146, %v1143, %v1145
        %v1151 = vmul.f32 %v654, %v1143
        %v1152 = vmul.f32 %v655, %v1147
        %v1153 = vmul.f32 %v656, %v1145
        %v1154 = vmul.f32 %v658, %v1143
        %v1155 = vmul.f32 %v659, %v1147
        %v1156 = vmul.f32 %v660, %v1145
        %1157 = vset.pattern.permute.xlu0 7
        %1158 = vperm.xlu0 %1157, %v661
        %v1159 = vpop.permute.xlu0 %1158
        %1161 = vset.pattern.permute.xlu0 7
        %1162 = vperm.xlu0 %1161, %v662
        %v1163 = vpop.permute.xlu0 %1162
        %v1165 = vmul.f32 %v1159, %v1151
        %v1166 = vmul.f32 %v1159, %v1152
        %v1167 = vmul.f32 %v1159, %v1153
        %v1168 = vmul.f32 %v1163, %v1154
        %v1169 = vmul.f32 %v1163, %v1155
        %v1170 = vmul.f32 %v1163, %v1156
        %1177 = vrot.lane.b32.xlu0 %v1165, 95
        %v1178 = vpop.permute.xlu0 %1177
        %1179 = vrot.lane.b32.xlu0 %v1166, 95
        %v1180 = vpop.permute.xlu0 %1179
        %1181 = vrot.lane.b32.xlu0 %v1167, 95
        %v1182 = vpop.permute.xlu0 %1181
        %1183 = vrot.lane.b32.xlu0 %v1168, 95
        %v1184 = vpop.permute.xlu0 %1183
        %1185 = vrot.lane.b32.xlu0 %v1169, 95
        %v1186 = vpop.permute.xlu0 %1185
        %1187 = vrot.lane.b32.xlu0 %v1170, 95
        %v1188 = vpop.permute.xlu0 %1187
        %vm1189 = vcmask 777216
        %v1190 = vsel %vm1189, %v1178, %v1180
        %v1191 = vsel %vm1189, %v1180, %v1182
        %v1192 = vsel %vm1189, %v1184, %v1186
        %v1193 = vsel %vm1189, %v1186, %v1188
        %v1200 = vadd.f32 %v1126, %v1178
        %v1201 = vadd.f32 %v1127, %v1190
        %v1202 = vadd.f32 %v1128, %v1191
        %v1203 = vadd.f32 %v1129, %v1184
        %v1204 = vadd.f32 %v1130, %v1192
        %v1205 = vadd.f32 %v1131, %v1193
        %v1206 = vlaneseq
        %v1207 = vshrl.u32 %v1206, 7
        %v1208 = vsub.s32 0, %v1207
        %v1209 = vrot.slane %v665, %v1208
        %v1210 = vlaneseq
        %v1211 = vshrl.u32 %v1210, 7
        %v1212 = vsub.s32 0, %v1211
        %v1213 = vrot.slane %v666, %v1212
        %1216 = vrot.lane.b32.xlu0 %v1209, 17
        %v1217 = vpop.permute.xlu0 %1216
        %1218 = vrot.lane.b32.xlu0 %v1213, 17
        %v1219 = vpop.permute.xlu0 %1218
        %vm1220 = vcmask 138240
        %v1221 = vsel %vm1220, %v1217, %v1219
        %v1225 = vmul.f32 %v654, %v1217
        %v1226 = vmul.f32 %v655, %v1221
        %v1227 = vmul.f32 %v656, %v1219
        %v1228 = vmul.f32 %v658, %v1217
        %v1229 = vmul.f32 %v659, %v1221
        %v1230 = vmul.f32 %v660, %v1219
        %1231 = vset.pattern.permute.xlu0 8
        %1232 = vperm.xlu0 %1231, %v661
        %v1233 = vpop.permute.xlu0 %1232
        %1235 = vset.pattern.permute.xlu0 8
        %1236 = vperm.xlu0 %1235, %v662
        %v1237 = vpop.permute.xlu0 %1236
        %v1239 = vmul.f32 %v1233, %v1225
        %v1240 = vmul.f32 %v1233, %v1226
        %v1241 = vmul.f32 %v1233, %v1227
        %v1242 = vmul.f32 %v1237, %v1228
        %v1243 = vmul.f32 %v1237, %v1229
        %v1244 = vmul.f32 %v1237, %v1230
        %1251 = vrot.lane.b32.xlu0 %v1239, 94
        %v1252 = vpop.permute.xlu0 %1251
        %1253 = vrot.lane.b32.xlu0 %v1240, 94
        %v1254 = vpop.permute.xlu0 %1253
        %1255 = vrot.lane.b32.xlu0 %v1241, 94
        %v1256 = vpop.permute.xlu0 %1255
        %1257 = vrot.lane.b32.xlu0 %v1242, 94
        %v1258 = vpop.permute.xlu0 %1257
        %1259 = vrot.lane.b32.xlu0 %v1243, 94
        %v1260 = vpop.permute.xlu0 %1259
        %1261 = vrot.lane.b32.xlu0 %v1244, 94
        %v1262 = vpop.permute.xlu0 %1261
        %vm1263 = vcmask 769024
        %v1264 = vsel %vm1263, %v1252, %v1254
        %v1265 = vsel %vm1263, %v1254, %v1256
        %v1266 = vsel %vm1263, %v1258, %v1260
        %v1267 = vsel %vm1263, %v1260, %v1262
        %v1274 = vadd.f32 %v1200, %v1252
        %v1275 = vadd.f32 %v1201, %v1264
        %v1276 = vadd.f32 %v1202, %v1265
        %v1277 = vadd.f32 %v1203, %v1258
        %v1278 = vadd.f32 %v1204, %v1266
        %v1279 = vadd.f32 %v1205, %v1267
        %v1280 = vld [vmem:[%s6] sm:$0xff]
        %v1281 = vld [vmem:[%s6 + $0x8] sm:$0xff]
        %1283 = vset.pattern.permute.xlu0 0
        %1284 = vperm.xlu0 %1283, %v1280
        %v1285 = vpop.permute.xlu0 %1284
        %1288 = vset.pattern.permute.xlu0 0
        %1289 = vperm.xlu0 %1288, %v1281
        %v1290 = vpop.permute.xlu0 %1289
        %v1292 = vmul.f32 %v1274, %v1285
        %v1293 = vmul.f32 %v1275, %v1285
        %v1294 = vmul.f32 %v1276, %v1285
        %v1295 = vmul.f32 %v1277, %v1290
        %v1296 = vmul.f32 %v1278, %v1290
        %v1297 = vmul.f32 %v1279, %v1290
        %v1298 = vld [vmem:[%s7] sm:$0xff]
        %v1299 = vld [vmem:[%s7 + $0x8] sm:$0xff]
        %1301 = vset.pattern.permute.xlu0 0
        %1302 = vperm.xlu0 %1301, %v1298
        %v1303 = vpop.permute.xlu0 %1302
        %1306 = vset.pattern.permute.xlu0 0
        %1307 = vperm.xlu0 %1306, %v1299
        %v1308 = vpop.permute.xlu0 %1307
        %v1310 = vadd.f32 %v1292, %v1303
        %v1311 = vadd.f32 %v1293, %v1303
        %v1312 = vadd.f32 %v1294, %v1303
        %v1313 = vadd.f32 %v1295, %v1308
        %v1314 = vadd.f32 %v1296, %v1308
        %v1315 = vadd.f32 %v1297, %v1308
        %v1316 = vxor.u32 %v1310, 2147483648
        %v1317 = vxor.u32 %v1311, 2147483648
        %v1318 = vxor.u32 %v1312, 2147483648
        %v1319 = vxor.u32 %v1313, 2147483648
        %v1320 = vxor.u32 %v1314, 2147483648
        %v1321 = vxor.u32 %v1315, 2147483648
        %v1322 = vmul.f32 %v1316, 1.442695
        %v1323 = vpow.pop %v1322
        %v1324 = vmul.f32 %v1317, 1.442695
        %v1325 = vpow.pop %v1324
        %v1326 = vmul.f32 %v1318, 1.442695
        %v1327 = vpow.pop %v1326
        %v1328 = vmul.f32 %v1319, 1.442695
        %v1329 = vpow.pop %v1328
        %v1330 = vmul.f32 %v1320, 1.442695
        %v1331 = vpow.pop %v1330
        %v1332 = vmul.f32 %v1321, 1.442695
        %v1333 = vpow.pop %v1332
        %v1334 = vadd.f32 %v1323, 1.0
        %v1335 = vadd.f32 %v1325, 1.0
        %v1336 = vadd.f32 %v1327, 1.0
        %v1337 = vadd.f32 %v1329, 1.0
        %v1338 = vadd.f32 %v1331, 1.0
        %v1339 = vadd.f32 %v1333, 1.0
        %v1340 = vrcp.pop %v1334
        %v1341 = vmul.f32 1.0, %v1340
        %v1342 = vrcp.pop %v1335
        %v1343 = vmul.f32 1.0, %v1342
        %v1344 = vrcp.pop %v1336
        %v1345 = vmul.f32 1.0, %v1344
        %v1346 = vrcp.pop %v1337
        %v1347 = vmul.f32 1.0, %v1346
        %v1348 = vrcp.pop %v1338
        %v1349 = vmul.f32 1.0, %v1348
        %v1350 = vrcp.pop %v1339
        %v1351 = vmul.f32 1.0, %v1350
        %v1352 = vmul.f32 %v1310, %v1341
        %v1353 = vmul.f32 %v1311, %v1343
        %v1354 = vmul.f32 %v1312, %v1345
        %v1355 = vmul.f32 %v1313, %v1347
        %v1356 = vmul.f32 %v1314, %v1349
        %v1357 = vmul.f32 %v1315, %v1351
        %1364 = vrot.lane.b32.xlu0 %v1352, 17
        %v1365 = vpop.permute.xlu0 %1364
        %1366 = vrot.lane.b32.xlu0 %v1353, 17
        %v1367 = vpop.permute.xlu0 %1366
        %1368 = vrot.lane.b32.xlu0 %v1354, 17
        %v1369 = vpop.permute.xlu0 %1368
        %1370 = vrot.lane.b32.xlu0 %v1355, 17
        %v1371 = vpop.permute.xlu0 %1370
        %1372 = vrot.lane.b32.xlu0 %v1356, 17
        %v1373 = vpop.permute.xlu0 %1372
        %1374 = vrot.lane.b32.xlu0 %v1357, 17
        %v1375 = vpop.permute.xlu0 %1374
        %v1376 = vsel %vm1220, %v1365, %v1367
        %v1377 = vsel %vm1220, %v1367, %v1369
        %v1378 = vsel %vm1220, %v1371, %v1373
        %v1379 = vsel %vm1220, %v1373, %v1375
        %v1384 = vadd.f32 %v1376, %v1377
        %1385 = vadd.xlane.f32.xlu0 %v1384
        %v1386 = vpop.xlane.xlu0 %1385
        %v1387 = vadd.f32 %v1378, %v1379
        %1388 = vadd.xlane.f32.xlu0 %v1387
        %v1389 = vpop.xlane.xlu0 %1388
        %v1390 = vmul.f32 %v1386, 0.00390625
        %v1391 = vmul.f32 %v1389, 0.00390625
        %v1392 = vld [vmem:[%s8] sm:$0xff]
        %v1393 = vld [vmem:[%s8 + $0x8] sm:$0xff]
        %v1394 = vmul.f32 %v1392, %v1390
        %v1395 = vmul.f32 %v1393, %v1391
        %vm1396 = vcmask 15360
        %v1397 = vsel %vm1396, %v1394, 0.0
        %v1398 = vsel %vm1396, %v1395, 0.0
        %v1399 = vadd.f32 %v1397, %v1398
        %v1400 = vrot.slane %v1399, 4
        %v1401 = vadd.f32 %v1399, %v1400
        %v1402 = vrot.slane %v1401, 2
        %v1403 = vadd.f32 %v1401, %v1402
        %v1404 = vrot.slane %v1403, 1
        %v1405 = vadd.f32 %v1403, %v1404
        %v1406 = vld [vmem:[%s9] sm:$0x1]
        %v1407 = vadd.f32 %v1405, %v1406
        %v1408 = vxor.u32 %v1407, 2147483648
        %v1409 = vmul.f32 %v1408, 1.442695
        %v1410 = vpow.pop %v1409
        %v1411 = vadd.f32 %v1410, 1.0
        %v1412 = vrcp.pop %v1411
        %v1413 = vmul.f32 1.0, %v1412
        %v1414 = vmul.f32 %v1407, %v1413
        %v1415 = vld [vmem:[%s10] sm:$0xff]
        %v1416 = vld [vmem:[%s10 + $0x8] sm:$0xff]
        %v1417 = vlaneseq
        %v1418 = vshrl.u32 %v1417, 7
        %v1419 = vsub.s32 0, %v1418
        %v1420 = vrot.slane %v1414, %v1419
        %v1421 = vmul.f32 %v1415, %v1420
        %v1422 = vmul.f32 %v1416, %v1420
        %v1423 = vsel %vm1396, %v1421, 0.0
        %1424 = vadd.xlane.f32.xlu0 %v1423
        %v1425 = vpop.xlane.xlu0 %1424
        %v1426 = vsel %vm1396, %v1422, 0.0
        %1427 = vadd.xlane.f32.xlu0 %v1426
        %v1428 = vpop.xlane.xlu0 %1427
        %v1429 = vld [vmem:[%s11] sm:$0xff]
        %v1430 = vld [vmem:[%s11 + $0x8] sm:$0xff]
        %v1431 = vadd.f32 %v1425, %v1429
        %v1432 = vadd.f32 %v1428, %v1430
        %v1433 = vxor.u32 %v1431, 2147483648
        %v1434 = vxor.u32 %v1432, 2147483648
        %v1435 = vmul.f32 %v1433, 1.442695
        %v1436 = vpow.pop %v1435
        %v1437 = vmul.f32 %v1434, 1.442695
        %v1438 = vpow.pop %v1437
        %v1439 = vadd.f32 %v1436, 1.0
        %v1440 = vadd.f32 %v1438, 1.0
        %v1441 = vrcp.pop %v1439
        %v1442 = vmul.f32 1.0, %v1441
        %v1443 = vrcp.pop %v1440
        %v1444 = vmul.f32 1.0, %v1443
        %1446 = vset.pattern.permute.xlu0 0
        %1447 = vperm.xlu0 %1446, %v1442
        %v1448 = vpop.permute.xlu0 %1447
        %1451 = vset.pattern.permute.xlu0 0
        %1452 = vperm.xlu0 %1451, %v1444
        %v1453 = vpop.permute.xlu0 %1452
        %v1455 = vmul.f32 %v1352, %v1448
        %v1456 = vmul.f32 %v1353, %v1448
        %v1457 = vmul.f32 %v1354, %v1448
        %v1458 = vmul.f32 %v1355, %v1453
        %v1459 = vmul.f32 %v1356, %v1453
        %v1460 = vmul.f32 %v1357, %v1453
        %v1461 = vld [vmem:[%s12] sm:$0xff]
        %1468 = vrot.lane.b32.xlu0 %v1455, 17
        %v1469 = vpop.permute.xlu0 %1468
        %1470 = vrot.lane.b32.xlu0 %v1456, 17
        %v1471 = vpop.permute.xlu0 %1470
        %1472 = vrot.lane.b32.xlu0 %v1457, 17
        %v1473 = vpop.permute.xlu0 %1472
        %1474 = vrot.lane.b32.xlu0 %v1458, 17
        %v1475 = vpop.permute.xlu0 %1474
        %1476 = vrot.lane.b32.xlu0 %v1459, 17
        %v1477 = vpop.permute.xlu0 %1476
        %1478 = vrot.lane.b32.xlu0 %v1460, 17
        %v1479 = vpop.permute.xlu0 %1478
        %v1480 = vsel %vm1220, %v1469, %v1471
        %v1481 = vsel %vm1220, %v1471, %v1473
        %v1482 = vsel %vm1220, %v1475, %v1477
        %v1483 = vsel %vm1220, %v1477, %v1479
        %v1489 = vsel %vm1146, %v1461, 0
        %1491 = vmatprep.subr.mxu0 %v1481
        %1492 = vmatpush1.msra.mxu0 %v1480
        %1493 = vmatprep.subr.mxu0 %v1483
        %1494 = vmatpush1.msra.mxu0 %v1482
        %1495 = vmatprep.subr.mxu0 0.0
        %1496 = vmatpush1.msra.mxu0 0.0
        %1497 = vmatprep.subr.mxu0 0.0
        %1498 = vmatpush1.msra.mxu0 0.0
        %1499 = vmatprep.subr.mxu0 0.0
        %1500 = vmatpush1.msra.mxu0 0.0
        %1501 = vmatprep.subr.mxu0 0.0
        %1502 = vmatpush1.msra.mxu0 0.0
        %1503 = vmatprep.subr.mxu0 0.0
        %1504 = vmatpush1.msra.mxu0 0.0
        %1505 = vmatprep.subr.mxu0 0.0
        %1506 = vmatpush1.msra.mxu0 0.0
        %1507 = vmatprep.subr.mxu0 0.0
        %1508 = vmatpush1.msra.mxu0 0.0
        %1509 = vmatprep.subr.mxu0 0.0
        %1510 = vmatpush1.msra.mxu0 0.0
        %1511 = vmatprep.subr.mxu0 0.0
        %1512 = vmatpush1.msra.mxu0 0.0
        %1513 = vmatprep.subr.mxu0 0.0
        %1514 = vmatpush1.msra.mxu0 0.0
        %1515 = vmatprep.subr.mxu0 0.0
        %1516 = vmatpush1.msra.mxu0 0.0
        %1517 = vmatprep.subr.mxu0 0.0
        %1518 = vmatpush1.msra.mxu0 0.0
        %1519 = vmatprep.subr.mxu0 0.0
        %1520 = vmatpush1.msra.mxu0 0.0
        %1521 = vmatprep.subr.mxu0 0.0
        %1522 = vmatpush1.msra.mxu0 0.0
        %1523 = vmatprep.subr.mxu0 0.0
        %1524 = vmatpush1.msra.mxu0 0.0
        %1525 = vmatprep.subr.mxu0 0.0
        %1526 = vmatpush1.msra.mxu0 0.0
        %1527 = vmatprep.subr.mxu0 0.0
        %1528 = vmatpush1.msra.mxu0 0.0
        %1529 = vmatprep.subr.mxu0 0.0
        %1530 = vmatpush1.msra.mxu0 0.0
        %1531 = vmatprep.subr.mxu0 0.0
        %1532 = vmatpush1.msra.mxu0 0.0
        %1533 = vmatprep.subr.mxu0 0.0
        %1534 = vmatpush1.msra.mxu0 0.0
        %1535 = vmatprep.subr.mxu0 0.0
        %1536 = vmatpush1.msra.mxu0 0.0
        %1537 = vmatprep.subr.mxu0 0.0
        %1538 = vmatpush1.msra.mxu0 0.0
        %1539 = vmatprep.subr.mxu0 0.0
        %1540 = vmatpush1.msra.mxu0 0.0
        %1541 = vmatprep.subr.mxu0 0.0
        %1542 = vmatpush1.msra.mxu0 0.0
        %1543 = vmatprep.subr.mxu0 0.0
        %1544 = vmatpush1.msra.mxu0 0.0
        %1545 = vmatprep.subr.mxu0 0.0
        %1546 = vmatpush1.msra.mxu0 0.0
        %1547 = vmatprep.subr.mxu0 0.0
        %1548 = vmatpush1.msra.mxu0 0.0
        %1549 = vmatprep.subr.mxu0 0.0
        %1550 = vmatpush1.msra.mxu0 0.0
        %1551 = vmatprep.subr.mxu0 0.0
        %1552 = vmatpush1.msra.mxu0 0.0
        %1553 = vmatprep.subr.mxu0 0.0
        %1554 = vmatpush1.msra.mxu0 0.0
        %1555 = vmatprep.mubr.f32.mxu0 0.0
        %1556 = vmatmul.mubr.f32.gmra.mrb[0].mxu0 %v1489
        %v1557 = vpop.f32.mrb[0].mxu0
        %v1558 = vadd.f32 0.0, %v1557
        %v1559 = vpop.f32.mrb[0].mxu0
        %v1560 = vadd.f32 0.0, %v1559
        %1561 = vdwg.mxu0
        %v1562 = vld [vmem:[%s13] sm:$0xff]
        %1564 = vset.pattern.permute.xlu0 0
        %1565 = vperm.xlu0 %1564, %v1562
        %v1566 = vpop.permute.xlu0 %1565
        %v1568 = vmul.f32 %v1558, %v1566
        %v1569 = vmul.f32 %v1560, %v1566
        %v1570 = vld [vmem:[%s14] sm:$0xff]
        %1572 = vset.pattern.permute.xlu0 0
        %1573 = vperm.xlu0 %1572, %v1570
        %v1574 = vpop.permute.xlu0 %1573
        %v1576 = vadd.f32 %v1568, %v1574
        %v1577 = vadd.f32 %v1569, %v1574
        %v1578 = vadd.f32 %v1576, %v493
        %v1579 = vadd.f32 %v1577, %v494
        %1580 = vst [vmem:[%s487] sm:$0xff] %v1578
        %1581 = vst [vmem:[%s487 + $0x8] sm:$0xff] %v1579
        %s1582 = sand.u32 %s357, 1
        %s1583 = scalar_lea.sflag [#allocation4], %s1582
        %s1584 = sand.u32 %s357, 1
        %s1585 = smul.addr %s1584, 16
        %s1586 = scalar_lea.vmem [#allocation3], %s1585
        // Predicated region
        $region81: #{tpu_custom_call.1} parent=79 // pred_check
          %p1587 = pneg %p367
        $region82: #{tpu_custom_call.1} parent=79 // pred_check_branch
          %1589 = sbr.rel (%p1587) target = $region84
        $region83: #{tpu_custom_call.1} parent=79 // pred_region
          %s1591 = ssub.s32 256, 256
          %1592 = vsyncadd %s1583, %s1591
          %s1593 = smul.addr %s29, 2
          %s1594 = smul.addr %s1593, 128
          %s1595 = scalar_lea.hbm %s15, %s1594
          %s1597 = sshll.u32 %s1586, 4
          %s1598 = int_to_ptr.vmem [resolvable:$true] %s1597
          %1600 = dma.vmem_to_hbm [thread:$0]  %s1598, 256, %s1595, %s1583
        $region84: #{tpu_custom_call.1} parent=79 // pred_fallthru
          _
      $region80: #{tpu_custom_call.1} parent=5 // pred_fallthru
        _
      %p1601 = scmp.le.s32.totalorder 2, %s24
      // Predicated region
      $region85: #{tpu_custom_call.1} parent=5 // pred_check
        %p1602 = pneg %p1601
      $region86: #{tpu_custom_call.1} parent=5 // pred_check_branch
        %1604 = sbr.rel (%p1602) target = $region88
      $region87: #{tpu_custom_call.1} parent=5 // pred_region
        %s1605 = ssub.s32 %s24, 2
        // Predicated region
        $region89: #{tpu_custom_call.1} parent=87 // pred_check
          %p1606 = pneg %p373
        $region90: #{tpu_custom_call.1} parent=87 // pred_check_branch
          %1608 = sbr.rel (%p1606) target = $region92
        $region91: #{tpu_custom_call.1} parent=87 // pred_region
          %s1609 = sand.u32 %s358, 1
          %s1610 = scalar_lea.sflag [#allocation4], %s1609
          %s1611 = sand.u32 %s358, 1
          %s1612 = smul.addr %s1611, 16
          %s1613 = scalar_lea.vmem [#allocation3], %s1612
          %1614 = dma.done %s1610, 256
        $region92: #{tpu_custom_call.1} parent=87 // pred_fallthru
          _
      $region88: #{tpu_custom_call.1} parent=5 // pred_fallthru
        _
    $region6: #{tpu_custom_call.1} parent=1 // loop_footer
      %s28 = sadd.s32 1, %s24
    $region7: #{tpu_custom_call.1} parent=1 // loop_footer_branch
      %23 = sbr.rel target = $region3
    $region8: #{tpu_custom_call.1} parent=1 // loop_exit
      _
    %1615 = vsyncpa [#allocation4], 1
    %s1616 = scalar_lea.sflag [#allocation4], 1
    %1617 = vsyncpa %s1616, 1

</llo_original>
